<compile_context>
chip_gen: v6e
topology: v6e:2x2x1
jax: 0.10.0
libtpu: 0.0.40
codegen_flags: <defaults>
</compile_context>

<pallas_src>
import functools

import jax
import jax.numpy as jnp
from jax import lax
from jax.experimental import pallas as pl
from jax.experimental.pallas import tpu as pltpu

INPUT_SIZE = 1
HIDDEN = 100
OUTPUT_SIZE = 1
HP = 128  # hidden size padded to the 128-lane width (padded lanes stay exactly 0)


def lstm_kernel(len_ref, xp_ref, whh_ref, wlin_ref, blin_ref, out_ref,
                h_scr, c_scr, *, time_chunk, unroll):
    # len_ref : SMEM (1,) int32     actual sequence length (scalar prefetch)
    # xp_ref  : VMEM (TL, 4*HP) f32 precomputed x*W_ih + (b_ih + b_hh), this time chunk
    # whh_ref : VMEM (HP, 4*HP)     recurrent weights, transposed & padded (bf16 or f32)
    # wlin_ref: VMEM (1, HP)  f32   final linear weight row (padded)
    # blin_ref: VMEM (1, 1)   f32   final linear bias
    # out_ref : VMEM (1, 1)   f32   predictions[-1]
    # h_scr/c_scr: VMEM (1, HP) f32 state persisted across grid (time-chunk) steps
    chunk = pl.program_id(0)
    n_chunks = pl.num_programs(0)
    seq_len = len_ref[0]
    base = chunk * time_chunk

    @pl.when(chunk == 0)
    def _init():
        h_scr[...] = jnp.zeros_like(h_scr)
        c_scr[...] = jnp.zeros_like(c_scr)

    whh = whh_ref[...]  # loop-invariant; hoisted out of the recurrence

    def step(t, carry):
        h, c = carry
        gates = xp_ref[pl.ds(t, 1), :] + jnp.dot(
            h.astype(whh.dtype), whh, preferred_element_type=jnp.float32)
        # PyTorch gate order: i, f, g, o — each in its own lane-aligned HP block.
        i_g = jax.nn.sigmoid(gates[:, 0 * HP:1 * HP])
        f_g = jax.nn.sigmoid(gates[:, 1 * HP:2 * HP])
        g_g = jnp.tanh(gates[:, 2 * HP:3 * HP])
        o_g = jax.nn.sigmoid(gates[:, 3 * HP:4 * HP])
        c_new = f_g * c + i_g * g_g
        h_new = o_g * jnp.tanh(c_new)
        valid = (base + t) < seq_len          # mask padded tail timesteps
        h = jnp.where(valid, h_new, h)
        c = jnp.where(valid, c_new, c)
        return (h, c)

    # (h, c) stay in vregs for the whole chunk; only one scratch store per chunk.
    h, c = lax.fori_loop(0, time_chunk, step, (h_scr[...], c_scr[...]),
                         unroll=unroll)
    h_scr[...] = h
    c_scr[...] = c

    @pl.when(chunk == n_chunks - 1)
    def _finalize():
        # Linear(HIDDEN -> 1) as VPU multiply + lane reduction (avoids an N=1 matmul).
        out_ref[...] = (jnp.sum(h * wlin_ref[...], axis=-1, keepdims=True)
                        + blin_ref[...])


def _pack_params(wih, whh, bih, bhh, wlin, blin, recurrent_dtype=jnp.bfloat16):
    """Transpose to (in, out) layout, zero-pad hidden dim 100 -> 128 per gate block."""
    H = HIDDEN
    wih_row_p = jnp.zeros((4 * HP,), jnp.float32)          # W_ih has a single column
    b_p = jnp.zeros((4 * HP,), jnp.float32)                # b_ih + b_hh
    whh_p = jnp.zeros((HP, 4 * HP), jnp.float32)
    for g in range(4):
        wih_row_p = wih_row_p.at[g * HP:g * HP + H].set(wih[g * H:(g + 1) * H, 0])
        b_p = b_p.at[g * HP:g * HP + H].set(
            bih[g * H:(g + 1) * H] + bhh[g * H:(g + 1) * H])
        whh_p = whh_p.at[:H, g * HP:g * HP + H].set(whh[g * H:(g + 1) * H, :].T)
    whh_p = whh_p.astype(recurrent_dtype)
    wlin_row_p = jnp.zeros((1, HP), jnp.float32).at[0, :H].set(wlin[0, :])
    blin_p = blin.reshape(1, 1).astype(jnp.float32)
    return wih_row_p, b_p, whh_p, wlin_row_p, blin_p


def lstm_predict(input_seq, packed_params, *, time_chunk=None):
    """Equivalent of LSTM.forward(input_seq): returns predictions[-1], shape (1,)."""
    wih_row_p, b_p, whh_p, wlin_row_p, blin_p = packed_params
    x = input_seq.reshape(-1).astype(jnp.float32)
    L = x.shape[0]

    # Input projection on the VPU in the wrapper (INPUT_SIZE == 1).
    xp = x[:, None] * wih_row_p[None, :] + b_p[None, :]    # (L, 4*HP) f32

    if time_chunk is None:
        time_chunk = 8 * pl.cdiv(L, 8) if L <= 512 else 512
    assert time_chunk % 8 == 0, "time_chunk must be a multiple of 8 sublanes"
    n_chunks = pl.cdiv(L, time_chunk)
    Lp = n_chunks * time_chunk
    if Lp != L:
        xp = jnp.concatenate(
            [xp, jnp.zeros((Lp - L, 4 * HP), jnp.float32)], axis=0)
    unroll = True if time_chunk <= 32 else 8
    seq_len = jnp.array([L], jnp.int32)

    kernel = functools.partial(lstm_kernel, time_chunk=time_chunk, unroll=unroll)
    out = pl.pallas_call(
        kernel,
        out_shape=jax.ShapeDtypeStruct((1, OUTPUT_SIZE), jnp.float32),
        grid_spec=pltpu.PrefetchScalarGridSpec(
            num_scalar_prefetch=1,
            grid=(n_chunks,),
            in_specs=[
                pl.BlockSpec((time_chunk, 4 * HP), lambda c, n: (c, 0)),  # xp chunk
                pl.BlockSpec((HP, 4 * HP), lambda c, n: (0, 0)),          # W_hh
                pl.BlockSpec((1, HP), lambda c, n: (0, 0)),               # W_lin row
                pl.BlockSpec((1, OUTPUT_SIZE), lambda c, n: (0, 0)),      # b_lin
            ],
            out_specs=pl.BlockSpec((1, OUTPUT_SIZE), lambda c, n: (0, 0)),
            scratch_shapes=[
                pltpu.VMEM((1, HP), jnp.float32),   # h (persistent across chunks)
                pltpu.VMEM((1, HP), jnp.float32),   # c (persistent across chunks)
            ],
        ),
        compiler_params=pltpu.CompilerParams(
            dimension_semantics=("arbitrary",)),
    )(seq_len, xp, whh_p, wlin_row_p, blin_p)
    return out.reshape(OUTPUT_SIZE)


def lstm_ref(input_seq, wih, whh, bih, bhh, wlin, blin):
    """Pure-JAX f32 reference matching torch.nn.LSTM + Linear semantics."""
    x = input_seq.reshape(-1, 1, INPUT_SIZE).astype(jnp.float32)
    H = HIDDEN
    h = jnp.zeros((1, H), jnp.float32)
    c = jnp.zeros((1, H), jnp.float32)

    def step(carry, xt):
        h, c = carry
        gates = xt @ wih.T + bih + h @ whh.T + bhh
        i = jax.nn.sigmoid(gates[:, :H])
        f = jax.nn.sigmoid(gates[:, H:2 * H])
        g = jnp.tanh(gates[:, 2 * H:3 * H])
        o = jax.nn.sigmoid(gates[:, 3 * H:])
        c = f * c + i * g
        h = o * jnp.tanh(c)
        return (h, c), h

    (_, _), hs = lax.scan(step, (h, c), x)
    preds = hs[:, 0, :] @ wlin.T + blin
    return preds[-1]


if __name__ == "__main__":
    key = jax.random.PRNGKey(0)
    k_wih, k_whh, k_bih, k_bhh, k_wl, k_bl, k_x1, k_x2 = jax.random.split(key, 8)
    bound = 1.0 / jnp.sqrt(jnp.float32(HIDDEN))

    # Deterministic parameter init (PyTorch default: U(-1/sqrt(H), 1/sqrt(H))).
    wih = jax.random.uniform(k_wih, (4 * HIDDEN, INPUT_SIZE), jnp.float32, -bound, bound)
    whh = jax.random.uniform(k_whh, (4 * HIDDEN, HIDDEN), jnp.float32, -bound, bound)
    bih = jax.random.uniform(k_bih, (4 * HIDDEN,), jnp.float32, -bound, bound)
    bhh = jax.random.uniform(k_bhh, (4 * HIDDEN,), jnp.float32, -bound, bound)
    wlin = jax.random.uniform(k_wl, (OUTPUT_SIZE, HIDDEN), jnp.float32, -bound, bound)
    blin = jax.random.uniform(k_bl, (OUTPUT_SIZE,), jnp.float32, -bound, bound)

    # Small sequence consistent with the module (1-D sequence, input_size=1).
    L = 8
    input_seq = jax.random.normal(k_x1, (L,), jnp.float32)
    ref = lstm_ref(input_seq, wih, whh, bih, bhh, wlin, blin)

    # 1) Strict semantic check with f32 recurrent weights (1e-4 tolerance).
    packed_f32 = _pack_params(wih, whh, bih, bhh, wlin, blin,
                              recurrent_dtype=jnp.float32)
    out_f32 = jax.block_until_ready(lstm_predict(input_seq, packed_f32))
    assert out_f32.shape == (OUTPUT_SIZE,)
    assert jnp.allclose(out_f32, ref, atol=1e-4, rtol=1e-4), (out_f32, ref)

    # 2) Performance default: bf16 recurrent weights on the MXU (f32 accumulate).
    #    bf16 weights relax the match vs. the f32 reference to ~1e-3 level.
    packed_bf16 = _pack_params(wih, whh, bih, bhh, wlin, blin,
                               recurrent_dtype=jnp.bfloat16)
    out_bf16 = jax.block_until_ready(lstm_predict(input_seq, packed_bf16))
    assert jnp.allclose(out_bf16, ref, atol=5e-3, rtol=5e-3), (out_bf16, ref)

    # 3) Exercise the multi-chunk grid + ragged-tail masking path at small size.
    L2 = 20
    input_seq2 = jax.random.normal(k_x2, (L2,), jnp.float32)
    ref2 = lstm_ref(input_seq2, wih, whh, bih, bhh, wlin, blin)
    out2 = jax.block_until_ready(
        lstm_predict(input_seq2, packed_f32, time_chunk=8))   # 3 chunks, 4 masked steps
    assert jnp.allclose(out2, ref2, atol=1e-4, rtol=1e-4), (out2, ref2)

    print("KERNEL_OK")
</pallas_src>

<mosaic_0001>
module attributes {stable_mosaic.version = 11 : i64} {
  func.func @lstm_kernel(%arg0: i32, %arg1: memref<1xi32, #tpu.memory_space<smem>>, %arg2: memref<8x512xf32, #tpu.memory_space<vmem>>, %arg3: memref<128x512xf32, #tpu.memory_space<vmem>>, %arg4: memref<1x128xf32, #tpu.memory_space<vmem>>, %arg5: memref<1x1xf32, #tpu.memory_space<vmem>>, %arg6: memref<1x1xf32, #tpu.memory_space<vmem>>, %arg7: memref<1x128xf32, #tpu.memory_space<vmem>>, %arg8: memref<1x128xf32, #tpu.memory_space<vmem>>) attributes {dimension_semantics = [#tpu.dimension_semantics<arbitrary>], iteration_bounds = array<i64: 1>, scalar_prefetch = 1 : i64, scratch_operands = 2 : i64, tpu.core_type = #tpu.core_type<tc>, window_params = [{transform_indices = @transform_0, window_bounds = array<i64: 8, 512>}, {pipeline_mode = #tpu.pipeline_mode<synchronous>, transform_indices = @transform_1, window_bounds = array<i64: 128, 512>}, {pipeline_mode = #tpu.pipeline_mode<synchronous>, transform_indices = @transform_2, window_bounds = array<i64: 1, 128>}, {pipeline_mode = #tpu.pipeline_mode<synchronous>, transform_indices = @transform_3, window_bounds = array<i64: 1, 1>}, {pipeline_mode = #tpu.pipeline_mode<synchronous>, transform_indices = @transform_4, window_bounds = array<i64: 1, 1>}]} {
    %c0 = arith.constant 0 : index
    %0 = memref.load %arg1[%c0] : memref<1xi32, #tpu.memory_space<smem>>
    %c8_i32 = arith.constant 8 : i32
    %1 = arith.muli %arg0, %c8_i32 : i32
    %c0_i32 = arith.constant 0 : i32
    %2 = arith.cmpi eq, %arg0, %c0_i32 : i32
    %3 = arith.extui %2 : i1 to i32
    %c0_i32_0 = arith.constant 0 : i32
    %4 = arith.cmpi ne, %3, %c0_i32_0 : i32
    scf.if %4 {
      %cst_54 = arith.constant 0.000000e+00 : f32
      %277 = vector.broadcast %cst_54 : f32 to vector<1x128xf32>
      %c0_55 = arith.constant 0 : index
      %c0_56 = arith.constant 0 : index
      %278 = vector.load %arg7[%c0_55, %c0_56] : memref<1x128xf32, #tpu.memory_space<vmem>>, vector<1x128xf32>
      tpu.vector_store %arg7[%c0_55, %c0_56], %277 {strides = array<i32>} : memref<1x128xf32, #tpu.memory_space<vmem>>, vector<1x128xf32>,
      %cst_57 = arith.constant 0.000000e+00 : f32
      %279 = vector.broadcast %cst_57 : f32 to vector<1x128xf32>
      %c0_58 = arith.constant 0 : index
      %c0_59 = arith.constant 0 : index
      %280 = vector.load %arg8[%c0_58, %c0_59] : memref<1x128xf32, #tpu.memory_space<vmem>>, vector<1x128xf32>
      tpu.vector_store %arg8[%c0_58, %c0_59], %279 {strides = array<i32>} : memref<1x128xf32, #tpu.memory_space<vmem>>, vector<1x128xf32>,
    } else {
    }
    %c0_1 = arith.constant 0 : index
    %c0_2 = arith.constant 0 : index
    %5 = vector.load %arg3[%c0_1, %c0_2] : memref<128x512xf32, #tpu.memory_space<vmem>>, vector<128x512xf32>
    %c0_3 = arith.constant 0 : index
    %c0_4 = arith.constant 0 : index
    %6 = vector.load %arg7[%c0_3, %c0_4] : memref<1x128xf32, #tpu.memory_space<vmem>>, vector<1x128xf32>
    %c0_5 = arith.constant 0 : index
    %c0_6 = arith.constant 0 : index
    %7 = vector.load %arg8[%c0_5, %c0_6] : memref<1x128xf32, #tpu.memory_space<vmem>>, vector<1x128xf32>
    %c0_i32_7 = arith.constant 0 : i32
    %8 = arith.index_cast %c0_i32_7 : i32 to index
    %c0_8 = arith.constant 0 : index
    %9 = vector.load %arg2[%8, %c0_8] : memref<8x512xf32, #tpu.memory_space<vmem>>, vector<1x512xf32>
    %cst = arith.constant dense<0.000000e+00> : vector<1x512xf32>
    %10 = tpu.matmul %6, %5, %cst {dimension_numbers = #tpu.dot_dimension_numbers<[1], [0], [0], [1], [0, 0, 1, 1], [], []>} : vector<1x128xf32>, vector<128x512xf32>, vector<1x512xf32> -> vector<1x512xf32>
    %11 = arith.addf %9, %10 : vector<1x512xf32>
    %12 = vector.extract_strided_slice %11 {offsets = [0, 0], sizes = [1, 128], strides = [1, 1]} : vector<1x512xf32> to vector<1x128xf32>
    %13 = arith.negf %12 : vector<1x128xf32>
    %14 = math.exp %13 : vector<1x128xf32>
    %cst_9 = arith.constant 1.000000e+00 : f32
    %15 = vector.broadcast %cst_9 : f32 to vector<1x128xf32>
    %16 = arith.addf %15, %14 : vector<1x128xf32>
    %17 = arith.divf %15, %16 : vector<1x128xf32>
    %18 = vector.extract_strided_slice %11 {offsets = [0, 128], sizes = [1, 128], strides = [1, 1]} : vector<1x512xf32> to vector<1x128xf32>
    %19 = arith.negf %18 : vector<1x128xf32>
    %20 = math.exp %19 : vector<1x128xf32>
    %cst_10 = arith.constant 1.000000e+00 : f32
    %21 = vector.broadcast %cst_10 : f32 to vector<1x128xf32>
    %22 = arith.addf %21, %20 : vector<1x128xf32>
    %23 = arith.divf %21, %22 : vector<1x128xf32>
    %24 = vector.extract_strided_slice %11 {offsets = [0, 256], sizes = [1, 128], strides = [1, 1]} : vector<1x512xf32> to vector<1x128xf32>
    %25 = math.tanh %24 : vector<1x128xf32>
    %26 = vector.extract_strided_slice %11 {offsets = [0, 384], sizes = [1, 128], strides = [1, 1]} : vector<1x512xf32> to vector<1x128xf32>
    %27 = arith.negf %26 : vector<1x128xf32>
    %28 = math.exp %27 : vector<1x128xf32>
    %cst_11 = arith.constant 1.000000e+00 : f32
    %29 = vector.broadcast %cst_11 : f32 to vector<1x128xf32>
    %30 = arith.addf %29, %28 : vector<1x128xf32>
    %31 = arith.divf %29, %30 : vector<1x128xf32>
    %32 = arith.mulf %23, %7 : vector<1x128xf32>
    %33 = arith.mulf %17, %25 : vector<1x128xf32>
    %34 = arith.addf %32, %33 : vector<1x128xf32>
    %35 = math.tanh %34 : vector<1x128xf32>
    %36 = arith.mulf %31, %35 : vector<1x128xf32>
    %37 = arith.addi %1, %c0_i32_7 : i32
    %38 = arith.cmpi slt, %37, %0 : i32
    %39 = arith.select %38, %36, %6 : vector<1x128xf32>
    %40 = arith.select %38, %34, %7 : vector<1x128xf32>
    %c1_i32 = arith.constant 1 : i32
    %41 = arith.index_cast %c1_i32 : i32 to index
    %c0_12 = arith.constant 0 : index
    %42 = vector.load %arg2[%41, %c0_12] : memref<8x512xf32, #tpu.memory_space<vmem>>, vector<1x512xf32>
    %cst_13 = arith.constant dense<0.000000e+00> : vector<1x512xf32>
    %43 = tpu.matmul %39, %5, %cst_13 {dimension_numbers = #tpu.dot_dimension_numbers<[1], [0], [0], [1], [0, 0, 1, 1], [], []>} : vector<1x128xf32>, vector<128x512xf32>, vector<1x512xf32> -> vector<1x512xf32>
    %44 = arith.addf %42, %43 : vector<1x512xf32>
    %45 = vector.extract_strided_slice %44 {offsets = [0, 0], sizes = [1, 128], strides = [1, 1]} : vector<1x512xf32> to vector<1x128xf32>
    %46 = arith.negf %45 : vector<1x128xf32>
    %47 = math.exp %46 : vector<1x128xf32>
    %cst_14 = arith.constant 1.000000e+00 : f32
    %48 = vector.broadcast %cst_14 : f32 to vector<1x128xf32>
    %49 = arith.addf %48, %47 : vector<1x128xf32>
    %50 = arith.divf %48, %49 : vector<1x128xf32>
    %51 = vector.extract_strided_slice %44 {offsets = [0, 128], sizes = [1, 128], strides = [1, 1]} : vector<1x512xf32> to vector<1x128xf32>
    %52 = arith.negf %51 : vector<1x128xf32>
    %53 = math.exp %52 : vector<1x128xf32>
    %cst_15 = arith.constant 1.000000e+00 : f32
    %54 = vector.broadcast %cst_15 : f32 to vector<1x128xf32>
    %55 = arith.addf %54, %53 : vector<1x128xf32>
    %56 = arith.divf %54, %55 : vector<1x128xf32>
    %57 = vector.extract_strided_slice %44 {offsets = [0, 256], sizes = [1, 128], strides = [1, 1]} : vector<1x512xf32> to vector<1x128xf32>
    %58 = math.tanh %57 : vector<1x128xf32>
    %59 = vector.extract_strided_slice %44 {offsets = [0, 384], sizes = [1, 128], strides = [1, 1]} : vector<1x512xf32> to vector<1x128xf32>
    %60 = arith.negf %59 : vector<1x128xf32>
    %61 = math.exp %60 : vector<1x128xf32>
    %cst_16 = arith.constant 1.000000e+00 : f32
    %62 = vector.broadcast %cst_16 : f32 to vector<1x128xf32>
    %63 = arith.addf %62, %61 : vector<1x128xf32>
    %64 = arith.divf %62, %63 : vector<1x128xf32>
    %65 = arith.mulf %56, %40 : vector<1x128xf32>
    %66 = arith.mulf %50, %58 : vector<1x128xf32>
    %67 = arith.addf %65, %66 : vector<1x128xf32>
    %68 = math.tanh %67 : vector<1x128xf32>
    %69 = arith.mulf %64, %68 : vector<1x128xf32>
    %70 = arith.addi %1, %c1_i32 : i32
    %71 = arith.cmpi slt, %70, %0 : i32
    %72 = arith.select %71, %69, %39 : vector<1x128xf32>
    %73 = arith.select %71, %67, %40 : vector<1x128xf32>
    %c2_i32 = arith.constant 2 : i32
    %74 = arith.index_cast %c2_i32 : i32 to index
    %c0_17 = arith.constant 0 : index
    %75 = vector.load %arg2[%74, %c0_17] : memref<8x512xf32, #tpu.memory_space<vmem>>, vector<1x512xf32>
    %cst_18 = arith.constant dense<0.000000e+00> : vector<1x512xf32>
    %76 = tpu.matmul %72, %5, %cst_18 {dimension_numbers = #tpu.dot_dimension_numbers<[1], [0], [0], [1], [0, 0, 1, 1], [], []>} : vector<1x128xf32>, vector<128x512xf32>, vector<1x512xf32> -> vector<1x512xf32>
    %77 = arith.addf %75, %76 : vector<1x512xf32>
    %78 = vector.extract_strided_slice %77 {offsets = [0, 0], sizes = [1, 128], strides = [1, 1]} : vector<1x512xf32> to vector<1x128xf32>
    %79 = arith.negf %78 : vector<1x128xf32>
    %80 = math.exp %79 : vector<1x128xf32>
    %cst_19 = arith.constant 1.000000e+00 : f32
    %81 = vector.broadcast %cst_19 : f32 to vector<1x128xf32>
    %82 = arith.addf %81, %80 : vector<1x128xf32>
    %83 = arith.divf %81, %82 : vector<1x128xf32>
    %84 = vector.extract_strided_slice %77 {offsets = [0, 128], sizes = [1, 128], strides = [1, 1]} : vector<1x512xf32> to vector<1x128xf32>
    %85 = arith.negf %84 : vector<1x128xf32>
    %86 = math.exp %85 : vector<1x128xf32>
    %cst_20 = arith.constant 1.000000e+00 : f32
    %87 = vector.broadcast %cst_20 : f32 to vector<1x128xf32>
    %88 = arith.addf %87, %86 : vector<1x128xf32>
    %89 = arith.divf %87, %88 : vector<1x128xf32>
    %90 = vector.extract_strided_slice %77 {offsets = [0, 256], sizes = [1, 128], strides = [1, 1]} : vector<1x512xf32> to vector<1x128xf32>
    %91 = math.tanh %90 : vector<1x128xf32>
    %92 = vector.extract_strided_slice %77 {offsets = [0, 384], sizes = [1, 128], strides = [1, 1]} : vector<1x512xf32> to vector<1x128xf32>
    %93 = arith.negf %92 : vector<1x128xf32>
    %94 = math.exp %93 : vector<1x128xf32>
    %cst_21 = arith.constant 1.000000e+00 : f32
    %95 = vector.broadcast %cst_21 : f32 to vector<1x128xf32>
    %96 = arith.addf %95, %94 : vector<1x128xf32>
    %97 = arith.divf %95, %96 : vector<1x128xf32>
    %98 = arith.mulf %89, %73 : vector<1x128xf32>
    %99 = arith.mulf %83, %91 : vector<1x128xf32>
    %100 = arith.addf %98, %99 : vector<1x128xf32>
    %101 = math.tanh %100 : vector<1x128xf32>
    %102 = arith.mulf %97, %101 : vector<1x128xf32>
    %103 = arith.addi %1, %c2_i32 : i32
    %104 = arith.cmpi slt, %103, %0 : i32
    %105 = arith.select %104, %102, %72 : vector<1x128xf32>
    %106 = arith.select %104, %100, %73 : vector<1x128xf32>
    %c3_i32 = arith.constant 3 : i32
    %107 = arith.index_cast %c3_i32 : i32 to index
    %c0_22 = arith.constant 0 : index
    %108 = vector.load %arg2[%107, %c0_22] : memref<8x512xf32, #tpu.memory_space<vmem>>, vector<1x512xf32>
    %cst_23 = arith.constant dense<0.000000e+00> : vector<1x512xf32>
    %109 = tpu.matmul %105, %5, %cst_23 {dimension_numbers = #tpu.dot_dimension_numbers<[1], [0], [0], [1], [0, 0, 1, 1], [], []>} : vector<1x128xf32>, vector<128x512xf32>, vector<1x512xf32> -> vector<1x512xf32>
    %110 = arith.addf %108, %109 : vector<1x512xf32>
    %111 = vector.extract_strided_slice %110 {offsets = [0, 0], sizes = [1, 128], strides = [1, 1]} : vector<1x512xf32> to vector<1x128xf32>
    %112 = arith.negf %111 : vector<1x128xf32>
    %113 = math.exp %112 : vector<1x128xf32>
    %cst_24 = arith.constant 1.000000e+00 : f32
    %114 = vector.broadcast %cst_24 : f32 to vector<1x128xf32>
    %115 = arith.addf %114, %113 : vector<1x128xf32>
    %116 = arith.divf %114, %115 : vector<1x128xf32>
    %117 = vector.extract_strided_slice %110 {offsets = [0, 128], sizes = [1, 128], strides = [1, 1]} : vector<1x512xf32> to vector<1x128xf32>
    %118 = arith.negf %117 : vector<1x128xf32>
    %119 = math.exp %118 : vector<1x128xf32>
    %cst_25 = arith.constant 1.000000e+00 : f32
    %120 = vector.broadcast %cst_25 : f32 to vector<1x128xf32>
    %121 = arith.addf %120, %119 : vector<1x128xf32>
    %122 = arith.divf %120, %121 : vector<1x128xf32>
    %123 = vector.extract_strided_slice %110 {offsets = [0, 256], sizes = [1, 128], strides = [1, 1]} : vector<1x512xf32> to vector<1x128xf32>
    %124 = math.tanh %123 : vector<1x128xf32>
    %125 = vector.extract_strided_slice %110 {offsets = [0, 384], sizes = [1, 128], strides = [1, 1]} : vector<1x512xf32> to vector<1x128xf32>
    %126 = arith.negf %125 : vector<1x128xf32>
    %127 = math.exp %126 : vector<1x128xf32>
    %cst_26 = arith.constant 1.000000e+00 : f32
    %128 = vector.broadcast %cst_26 : f32 to vector<1x128xf32>
    %129 = arith.addf %128, %127 : vector<1x128xf32>
    %130 = arith.divf %128, %129 : vector<1x128xf32>
    %131 = arith.mulf %122, %106 : vector<1x128xf32>
    %132 = arith.mulf %116, %124 : vector<1x128xf32>
    %133 = arith.addf %131, %132 : vector<1x128xf32>
    %134 = math.tanh %133 : vector<1x128xf32>
    %135 = arith.mulf %130, %134 : vector<1x128xf32>
    %136 = arith.addi %1, %c3_i32 : i32
    %137 = arith.cmpi slt, %136, %0 : i32
    %138 = arith.select %137, %135, %105 : vector<1x128xf32>
    %139 = arith.select %137, %133, %106 : vector<1x128xf32>
    %c4_i32 = arith.constant 4 : i32
    %140 = arith.index_cast %c4_i32 : i32 to index
    %c0_27 = arith.constant 0 : index
    %141 = vector.load %arg2[%140, %c0_27] : memref<8x512xf32, #tpu.memory_space<vmem>>, vector<1x512xf32>
    %cst_28 = arith.constant dense<0.000000e+00> : vector<1x512xf32>
    %142 = tpu.matmul %138, %5, %cst_28 {dimension_numbers = #tpu.dot_dimension_numbers<[1], [0], [0], [1], [0, 0, 1, 1], [], []>} : vector<1x128xf32>, vector<128x512xf32>, vector<1x512xf32> -> vector<1x512xf32>
    %143 = arith.addf %141, %142 : vector<1x512xf32>
    %144 = vector.extract_strided_slice %143 {offsets = [0, 0], sizes = [1, 128], strides = [1, 1]} : vector<1x512xf32> to vector<1x128xf32>
    %145 = arith.negf %144 : vector<1x128xf32>
    %146 = math.exp %145 : vector<1x128xf32>
    %cst_29 = arith.constant 1.000000e+00 : f32
    %147 = vector.broadcast %cst_29 : f32 to vector<1x128xf32>
    %148 = arith.addf %147, %146 : vector<1x128xf32>
    %149 = arith.divf %147, %148 : vector<1x128xf32>
    %150 = vector.extract_strided_slice %143 {offsets = [0, 128], sizes = [1, 128], strides = [1, 1]} : vector<1x512xf32> to vector<1x128xf32>
    %151 = arith.negf %150 : vector<1x128xf32>
    %152 = math.exp %151 : vector<1x128xf32>
    %cst_30 = arith.constant 1.000000e+00 : f32
    %153 = vector.broadcast %cst_30 : f32 to vector<1x128xf32>
    %154 = arith.addf %153, %152 : vector<1x128xf32>
    %155 = arith.divf %153, %154 : vector<1x128xf32>
    %156 = vector.extract_strided_slice %143 {offsets = [0, 256], sizes = [1, 128], strides = [1, 1]} : vector<1x512xf32> to vector<1x128xf32>
    %157 = math.tanh %156 : vector<1x128xf32>
    %158 = vector.extract_strided_slice %143 {offsets = [0, 384], sizes = [1, 128], strides = [1, 1]} : vector<1x512xf32> to vector<1x128xf32>
    %159 = arith.negf %158 : vector<1x128xf32>
    %160 = math.exp %159 : vector<1x128xf32>
    %cst_31 = arith.constant 1.000000e+00 : f32
    %161 = vector.broadcast %cst_31 : f32 to vector<1x128xf32>
    %162 = arith.addf %161, %160 : vector<1x128xf32>
    %163 = arith.divf %161, %162 : vector<1x128xf32>
    %164 = arith.mulf %155, %139 : vector<1x128xf32>
    %165 = arith.mulf %149, %157 : vector<1x128xf32>
    %166 = arith.addf %164, %165 : vector<1x128xf32>
    %167 = math.tanh %166 : vector<1x128xf32>
    %168 = arith.mulf %163, %167 : vector<1x128xf32>
    %169 = arith.addi %1, %c4_i32 : i32
    %170 = arith.cmpi slt, %169, %0 : i32
    %171 = arith.select %170, %168, %138 : vector<1x128xf32>
    %172 = arith.select %170, %166, %139 : vector<1x128xf32>
    %c5_i32 = arith.constant 5 : i32
    %173 = arith.index_cast %c5_i32 : i32 to index
    %c0_32 = arith.constant 0 : index
    %174 = vector.load %arg2[%173, %c0_32] : memref<8x512xf32, #tpu.memory_space<vmem>>, vector<1x512xf32>
    %cst_33 = arith.constant dense<0.000000e+00> : vector<1x512xf32>
    %175 = tpu.matmul %171, %5, %cst_33 {dimension_numbers = #tpu.dot_dimension_numbers<[1], [0], [0], [1], [0, 0, 1, 1], [], []>} : vector<1x128xf32>, vector<128x512xf32>, vector<1x512xf32> -> vector<1x512xf32>
    %176 = arith.addf %174, %175 : vector<1x512xf32>
    %177 = vector.extract_strided_slice %176 {offsets = [0, 0], sizes = [1, 128], strides = [1, 1]} : vector<1x512xf32> to vector<1x128xf32>
    %178 = arith.negf %177 : vector<1x128xf32>
    %179 = math.exp %178 : vector<1x128xf32>
    %cst_34 = arith.constant 1.000000e+00 : f32
    %180 = vector.broadcast %cst_34 : f32 to vector<1x128xf32>
    %181 = arith.addf %180, %179 : vector<1x128xf32>
    %182 = arith.divf %180, %181 : vector<1x128xf32>
    %183 = vector.extract_strided_slice %176 {offsets = [0, 128], sizes = [1, 128], strides = [1, 1]} : vector<1x512xf32> to vector<1x128xf32>
    %184 = arith.negf %183 : vector<1x128xf32>
    %185 = math.exp %184 : vector<1x128xf32>
    %cst_35 = arith.constant 1.000000e+00 : f32
    %186 = vector.broadcast %cst_35 : f32 to vector<1x128xf32>
    %187 = arith.addf %186, %185 : vector<1x128xf32>
    %188 = arith.divf %186, %187 : vector<1x128xf32>
    %189 = vector.extract_strided_slice %176 {offsets = [0, 256], sizes = [1, 128], strides = [1, 1]} : vector<1x512xf32> to vector<1x128xf32>
    %190 = math.tanh %189 : vector<1x128xf32>
    %191 = vector.extract_strided_slice %176 {offsets = [0, 384], sizes = [1, 128], strides = [1, 1]} : vector<1x512xf32> to vector<1x128xf32>
    %192 = arith.negf %191 : vector<1x128xf32>
    %193 = math.exp %192 : vector<1x128xf32>
    %cst_36 = arith.constant 1.000000e+00 : f32
    %194 = vector.broadcast %cst_36 : f32 to vector<1x128xf32>
    %195 = arith.addf %194, %193 : vector<1x128xf32>
    %196 = arith.divf %194, %195 : vector<1x128xf32>
    %197 = arith.mulf %188, %172 : vector<1x128xf32>
    %198 = arith.mulf %182, %190 : vector<1x128xf32>
    %199 = arith.addf %197, %198 : vector<1x128xf32>
    %200 = math.tanh %199 : vector<1x128xf32>
    %201 = arith.mulf %196, %200 : vector<1x128xf32>
    %202 = arith.addi %1, %c5_i32 : i32
    %203 = arith.cmpi slt, %202, %0 : i32
    %204 = arith.select %203, %201, %171 : vector<1x128xf32>
    %205 = arith.select %203, %199, %172 : vector<1x128xf32>
    %c6_i32 = arith.constant 6 : i32
    %206 = arith.index_cast %c6_i32 : i32 to index
    %c0_37 = arith.constant 0 : index
    %207 = vector.load %arg2[%206, %c0_37] : memref<8x512xf32, #tpu.memory_space<vmem>>, vector<1x512xf32>
    %cst_38 = arith.constant dense<0.000000e+00> : vector<1x512xf32>
    %208 = tpu.matmul %204, %5, %cst_38 {dimension_numbers = #tpu.dot_dimension_numbers<[1], [0], [0], [1], [0, 0, 1, 1], [], []>} : vector<1x128xf32>, vector<128x512xf32>, vector<1x512xf32> -> vector<1x512xf32>
    %209 = arith.addf %207, %208 : vector<1x512xf32>
    %210 = vector.extract_strided_slice %209 {offsets = [0, 0], sizes = [1, 128], strides = [1, 1]} : vector<1x512xf32> to vector<1x128xf32>
    %211 = arith.negf %210 : vector<1x128xf32>
    %212 = math.exp %211 : vector<1x128xf32>
    %cst_39 = arith.constant 1.000000e+00 : f32
    %213 = vector.broadcast %cst_39 : f32 to vector<1x128xf32>
    %214 = arith.addf %213, %212 : vector<1x128xf32>
    %215 = arith.divf %213, %214 : vector<1x128xf32>
    %216 = vector.extract_strided_slice %209 {offsets = [0, 128], sizes = [1, 128], strides = [1, 1]} : vector<1x512xf32> to vector<1x128xf32>
    %217 = arith.negf %216 : vector<1x128xf32>
    %218 = math.exp %217 : vector<1x128xf32>
    %cst_40 = arith.constant 1.000000e+00 : f32
    %219 = vector.broadcast %cst_40 : f32 to vector<1x128xf32>
    %220 = arith.addf %219, %218 : vector<1x128xf32>
    %221 = arith.divf %219, %220 : vector<1x128xf32>
    %222 = vector.extract_strided_slice %209 {offsets = [0, 256], sizes = [1, 128], strides = [1, 1]} : vector<1x512xf32> to vector<1x128xf32>
    %223 = math.tanh %222 : vector<1x128xf32>
    %224 = vector.extract_strided_slice %209 {offsets = [0, 384], sizes = [1, 128], strides = [1, 1]} : vector<1x512xf32> to vector<1x128xf32>
    %225 = arith.negf %224 : vector<1x128xf32>
    %226 = math.exp %225 : vector<1x128xf32>
    %cst_41 = arith.constant 1.000000e+00 : f32
    %227 = vector.broadcast %cst_41 : f32 to vector<1x128xf32>
    %228 = arith.addf %227, %226 : vector<1x128xf32>
    %229 = arith.divf %227, %228 : vector<1x128xf32>
    %230 = arith.mulf %221, %205 : vector<1x128xf32>
    %231 = arith.mulf %215, %223 : vector<1x128xf32>
    %232 = arith.addf %230, %231 : vector<1x128xf32>
    %233 = math.tanh %232 : vector<1x128xf32>
    %234 = arith.mulf %229, %233 : vector<1x128xf32>
    %235 = arith.addi %1, %c6_i32 : i32
    %236 = arith.cmpi slt, %235, %0 : i32
    %237 = arith.select %236, %234, %204 : vector<1x128xf32>
    %238 = arith.select %236, %232, %205 : vector<1x128xf32>
    %c7_i32 = arith.constant 7 : i32
    %239 = arith.index_cast %c7_i32 : i32 to index
    %c0_42 = arith.constant 0 : index
    %240 = vector.load %arg2[%239, %c0_42] : memref<8x512xf32, #tpu.memory_space<vmem>>, vector<1x512xf32>
    %cst_43 = arith.constant dense<0.000000e+00> : vector<1x512xf32>
    %241 = tpu.matmul %237, %5, %cst_43 {dimension_numbers = #tpu.dot_dimension_numbers<[1], [0], [0], [1], [0, 0, 1, 1], [], []>} : vector<1x128xf32>, vector<128x512xf32>, vector<1x512xf32> -> vector<1x512xf32>
    %242 = arith.addf %240, %241 : vector<1x512xf32>
    %243 = vector.extract_strided_slice %242 {offsets = [0, 0], sizes = [1, 128], strides = [1, 1]} : vector<1x512xf32> to vector<1x128xf32>
    %244 = arith.negf %243 : vector<1x128xf32>
    %245 = math.exp %244 : vector<1x128xf32>
    %cst_44 = arith.constant 1.000000e+00 : f32
    %246 = vector.broadcast %cst_44 : f32 to vector<1x128xf32>
    %247 = arith.addf %246, %245 : vector<1x128xf32>
    %248 = arith.divf %246, %247 : vector<1x128xf32>
    %249 = vector.extract_strided_slice %242 {offsets = [0, 128], sizes = [1, 128], strides = [1, 1]} : vector<1x512xf32> to vector<1x128xf32>
    %250 = arith.negf %249 : vector<1x128xf32>
    %251 = math.exp %250 : vector<1x128xf32>
    %cst_45 = arith.constant 1.000000e+00 : f32
    %252 = vector.broadcast %cst_45 : f32 to vector<1x128xf32>
    %253 = arith.addf %252, %251 : vector<1x128xf32>
    %254 = arith.divf %252, %253 : vector<1x128xf32>
    %255 = vector.extract_strided_slice %242 {offsets = [0, 256], sizes = [1, 128], strides = [1, 1]} : vector<1x512xf32> to vector<1x128xf32>
    %256 = math.tanh %255 : vector<1x128xf32>
    %257 = vector.extract_strided_slice %242 {offsets = [0, 384], sizes = [1, 128], strides = [1, 1]} : vector<1x512xf32> to vector<1x128xf32>
    %258 = arith.negf %257 : vector<1x128xf32>
    %259 = math.exp %258 : vector<1x128xf32>
    %cst_46 = arith.constant 1.000000e+00 : f32
    %260 = vector.broadcast %cst_46 : f32 to vector<1x128xf32>
    %261 = arith.addf %260, %259 : vector<1x128xf32>
    %262 = arith.divf %260, %261 : vector<1x128xf32>
    %263 = arith.mulf %254, %238 : vector<1x128xf32>
    %264 = arith.mulf %248, %256 : vector<1x128xf32>
    %265 = arith.addf %263, %264 : vector<1x128xf32>
    %266 = math.tanh %265 : vector<1x128xf32>
    %267 = arith.mulf %262, %266 : vector<1x128xf32>
    %268 = arith.addi %1, %c7_i32 : i32
    %269 = arith.cmpi slt, %268, %0 : i32
    %270 = arith.select %269, %267, %237 : vector<1x128xf32>
    %271 = arith.select %269, %265, %238 : vector<1x128xf32>
    %c8_i32_47 = arith.constant 8 : i32
    %c0_48 = arith.constant 0 : index
    %c0_49 = arith.constant 0 : index
    %272 = vector.load %arg7[%c0_48, %c0_49] : memref<1x128xf32, #tpu.memory_space<vmem>>, vector<1x128xf32>
    tpu.vector_store %arg7[%c0_48, %c0_49], %270 {strides = array<i32>} : memref<1x128xf32, #tpu.memory_space<vmem>>, vector<1x128xf32>,
    %c0_50 = arith.constant 0 : index
    %c0_51 = arith.constant 0 : index
    %273 = vector.load %arg8[%c0_50, %c0_51] : memref<1x128xf32, #tpu.memory_space<vmem>>, vector<1x128xf32>
    tpu.vector_store %arg8[%c0_50, %c0_51], %271 {strides = array<i32>} : memref<1x128xf32, #tpu.memory_space<vmem>>, vector<1x128xf32>,
    %c0_i32_52 = arith.constant 0 : i32
    %274 = arith.cmpi eq, %arg0, %c0_i32_52 : i32
    %275 = arith.extui %274 : i1 to i32
    %c0_i32_53 = arith.constant 0 : i32
    %276 = arith.cmpi ne, %275, %c0_i32_53 : i32
    scf.if %276 {
      %c0_54 = arith.constant 0 : index
      %c0_55 = arith.constant 0 : index
      %277 = vector.load %arg4[%c0_54, %c0_55] : memref<1x128xf32, #tpu.memory_space<vmem>>, vector<1x128xf32>
      %278 = arith.mulf %270, %277 : vector<1x128xf32>
      %cst_56 = arith.constant dense<0.000000e+00> : vector<1xf32>
      %279 = vector.multi_reduction <add>, %278, %cst_56 [1] : vector<1x128xf32> to vector<1xf32>
      %280 = vector.shape_cast %279 : vector<1xf32> to vector<1x1xf32>
      %c0_57 = arith.constant 0 : index
      %c0_58 = arith.constant 0 : index
      %281 = vector.load %arg5[%c0_57, %c0_58] : memref<1x1xf32, #tpu.memory_space<vmem>>, vector<1x1xf32>
      %282 = arith.addf %280, %281 : vector<1x1xf32>
      %c0_59 = arith.constant 0 : index
      %c0_60 = arith.constant 0 : index
      %283 = vector.load %arg6[%c0_59, %c0_60] : memref<1x1xf32, #tpu.memory_space<vmem>>, vector<1x1xf32>
      tpu.vector_store %arg6[%c0_59, %c0_60], %282 {strides = array<i32>} : memref<1x1xf32, #tpu.memory_space<vmem>>, vector<1x1xf32>,
    } else {
    }
    return
  }
  func.func @transform_0(%arg0: i32, %arg1: memref<1xi32, #tpu.memory_space<smem>>) -> (i32, i32) {
    %c0_i32 = arith.constant 0 : i32
    %c0_i32_0 = arith.constant 0 : i32
    return %arg0, %c0_i32 : i32, i32
  }
  func.func @transform_1(%arg0: i32, %arg1: memref<1xi32, #tpu.memory_space<smem>>) -> (i32, i32) {
    %c0_i32 = arith.constant 0 : i32
    %c0_i32_0 = arith.constant 0 : i32
    %c0_i32_1 = arith.constant 0 : i32
    return %c0_i32, %c0_i32_0 : i32, i32
  }
  func.func @transform_2(%arg0: i32, %arg1: memref<1xi32, #tpu.memory_space<smem>>) -> (i32, i32) {
    %c0_i32 = arith.constant 0 : i32
    %c0_i32_0 = arith.constant 0 : i32
    %c0_i32_1 = arith.constant 0 : i32
    return %c0_i32, %c0_i32_0 : i32, i32
  }
  func.func @transform_3(%arg0: i32, %arg1: memref<1xi32, #tpu.memory_space<smem>>) -> (i32, i32) {
    %c0_i32 = arith.constant 0 : i32
    %c0_i32_0 = arith.constant 0 : i32
    %c0_i32_1 = arith.constant 0 : i32
    return %c0_i32, %c0_i32_0 : i32, i32
  }
  func.func @transform_4(%arg0: i32, %arg1: memref<1xi32, #tpu.memory_space<smem>>) -> (i32, i32) {
    %c0_i32 = arith.constant 0 : i32
    %c0_i32_0 = arith.constant 0 : i32
    %c0_i32_1 = arith.constant 0 : i32
    return %c0_i32, %c0_i32_0 : i32, i32
  }
}

</mosaic_0001>

<llo_original>
// kernel: tpu_custom_call.1
$region0: #{tpu_custom_call.1}
  #allocation0 [shape = 'u32[]', space=smem, size = 0x4, offset = 0x4, fixed_abs, tag = 'smem constant byte address 0x4 - core index']
  #allocation1 [shape = 'u32[144,128]{1,0:T(1,128)}', space=vmem, size = 0x12000, scoped, tag = 'internal scratch']
  #allocation2 [shape = 'f32[1,128]{1,0:T(1,128)}', space=vmem, size = 0x200, scoped, tag = 'scratch operand']
  #allocation3 [shape = 'f32[1,128]{1,0:T(1,128)}', space=vmem, size = 0x200, scoped, tag = 'scratch operand']
  #allocation4 [shape = 's32[1]{0}', space=sflag, size = 0x4, scoped, tag = 'scoped memory for tpu_custom_call.1']
  #allocation5 [shape = 's32[1]{0:T(128)S(6)}', space=smem, size = 0x200, scoped, tag = 'prefetched SMEM operand 0']
  #allocation6 [shape = 'f32[1,1]{1,0:T(1,128)S(1)}', space=vmem, size = 0x200, scoped, tag = 'scoped memory for tpu_custom_call.1']
  %s0 = inlined_call_operand.<no memory space> [shape: s32[1], index: 0, kind: input, shape index: {}]
  %s1 = inlined_call_operand.hbm [shape: f32[8,512], index: 1, kind: input, shape index: {}]
  %s2 = inlined_call_operand.hbm [shape: f32[128,512], index: 2, kind: input, shape index: {}]
  %s3 = inlined_call_operand.vmem [shape: f32[1,128], index: 3, kind: input, shape index: {}]
  %s4 = inlined_call_operand.<no memory space> [shape: f32[1,1], index: 4, kind: input, shape index: {}]
  %s5 = inlined_call_operand.hbm [shape: f32[1,1], index: 5, kind: output, shape index: {}]
  %s6 = sld [smem:[#allocation0]]
  $region42: #{tpu_custom_call.1} parent=0
    _
  %s8 = ssub.s32 1, %s6
  %s9 = scalar_select 0, %s8, %s6
  %10 = sst [smem:[#allocation5]] %s0
  %v11 = vstv %s4
  %12 = vst [vmem:[#allocation6] sm:$0x1] %v11
  $region1: #{tpu_custom_call.1} parent=0
    #allocation7 [shape = 'u8[16384]{0}', space=vmem, size = 0x4000, scoped, tag = 'input window, operand 1, single buffered']
    #allocation8 [shape = 's32[1]{0}', space=sflag, size = 0x4, scoped, tag = 'scoped memory for tpu_custom_call.1']
    #allocation9 [shape = 's32[1]{0}', space=sflag, size = 0x4, scoped, tag = 'scoped memory for tpu_custom_call.1']
    #allocation10 [shape = 'u8[262144]{0}', space=vmem, size = 0x40000, scoped, tag = 'input window, operand 2, single buffered']
    #allocation11 [shape = 's32[1]{0}', space=sflag, size = 0x4, scoped, tag = 'scoped memory for tpu_custom_call.1']
    #allocation12 [shape = 'u8[512]{0}', space=vmem, size = 0x400, scoped, tag = 'output window, operand 0, single buffered']
    %13 = vsyncpa [#allocation8], 0
    %14 = vsyncpa [#allocation11], 0
    %15 = vsyncpa [#allocation9], 0
    // Predicated region
    $region2: #{tpu_custom_call.1} parent=1 // pred_check
      _
    $region3: #{tpu_custom_call.1} parent=1 // pred_check_branch
      %17 = sbr.rel (0) target = $region5
    $region4: #{tpu_custom_call.1} parent=1 // pred_region
      %s19 = ssub.s32 512, 512
      %20 = vsyncadd [#allocation8], %s19
      %s22 = sshll.u32 [#allocation7], 4
      %s23 = int_to_ptr.vmem [resolvable:$true] %s22
      %25 = dma.hbm_to_vmem [thread:$0]  %s1, 512, %s23, [#allocation8]
    $region5: #{tpu_custom_call.1} parent=1 // pred_fallthru
      _
    // Predicated region
    $region6: #{tpu_custom_call.1} parent=1 // pred_check
      _
    $region7: #{tpu_custom_call.1} parent=1 // pred_check_branch
      %27 = sbr.rel (0) target = $region9
    $region8: #{tpu_custom_call.1} parent=1 // pred_region
      %s29 = ssub.s32 8192, 8192
      %30 = vsyncadd [#allocation11], %s29
      %s31 = sshll.u32 [#allocation10], 4
      %s32 = int_to_ptr.vmem [resolvable:$true] %s31
      %37 = dma.hbm_to_vmem [thread:$0]  %s2, 8192, %s32, [#allocation11], 512, 512, 32
    $region9: #{tpu_custom_call.1} parent=1 // pred_fallthru
      _
    // Predicated region
    $region10: #{tpu_custom_call.1} parent=1 // pred_check
      _
    $region11: #{tpu_custom_call.1} parent=1 // pred_check_branch
      %39 = sbr.rel (0) target = $region13
    $region12: #{tpu_custom_call.1} parent=1 // pred_region
      _
    $region13: #{tpu_custom_call.1} parent=1 // pred_fallthru
      _
    // Predicated region
    $region14: #{tpu_custom_call.1} parent=1 // pred_check
      _
    $region15: #{tpu_custom_call.1} parent=1 // pred_check_branch
      %41 = sbr.rel (0) target = $region17
    $region16: #{tpu_custom_call.1} parent=1 // pred_region
      _
    $region17: #{tpu_custom_call.1} parent=1 // pred_fallthru
      _
    // Predicated region
    $region18: #{tpu_custom_call.1} parent=1 // pred_check
      _
    $region19: #{tpu_custom_call.1} parent=1 // pred_check_branch
      %43 = sbr.rel (0) target = $region21
    $region20: #{tpu_custom_call.1} parent=1 // pred_region
      %44 = dma.done [#allocation8], 512
    $region21: #{tpu_custom_call.1} parent=1 // pred_fallthru
      _
    // Predicated region
    $region22: #{tpu_custom_call.1} parent=1 // pred_check
      _
    $region23: #{tpu_custom_call.1} parent=1 // pred_check_branch
      %46 = sbr.rel (0) target = $region25
    $region24: #{tpu_custom_call.1} parent=1 // pred_region
      %47 = dma.done [#allocation11], 8192
    $region25: #{tpu_custom_call.1} parent=1 // pred_fallthru
      _
    %s48 = sld [smem:[#allocation5]]
    %s49 = smul.u32 0, 8
    %p50 = scmp.eq.s32.totalorder 0, 0
    // Predicated region
    $region26: #{tpu_custom_call.1} parent=1 // pred_check
      %p51 = pneg %p50
    $region27: #{tpu_custom_call.1} parent=1 // pred_check_branch
      %53 = sbr.rel (%p51) target = $region29
    $region28: #{tpu_custom_call.1} parent=1 // pred_region
      %54 = vst [vmem:[#allocation2] sm:$0x1] 0.0
      %55 = vst [vmem:[#allocation3] sm:$0x1] 0.0
    $region29: #{tpu_custom_call.1} parent=1 // pred_fallthru
      _
    %v56 = vld [vmem:[#allocation10] sm:$0xff]
    %v57 = vld [vmem:[#allocation10 + $0x8] sm:$0xff]
    %v58 = vld [vmem:[#allocation10 + $0x10] sm:$0xff]
    %v59 = vld [vmem:[#allocation10 + $0x18] sm:$0xff]
    %v60 = vld [vmem:[#allocation10 + $0x20] sm:$0xff]
    %v61 = vld [vmem:[#allocation10 + $0x28] sm:$0xff]
    %v62 = vld [vmem:[#allocation10 + $0x30] sm:$0xff]
    %v63 = vld [vmem:[#allocation10 + $0x38] sm:$0xff]
    %v64 = vld [vmem:[#allocation10 + $0x40] sm:$0xff]
    %v65 = vld [vmem:[#allocation10 + $0x48] sm:$0xff]
    %v66 = vld [vmem:[#allocation10 + $0x50] sm:$0xff]
    %v67 = vld [vmem:[#allocation10 + $0x58] sm:$0xff]
    %v68 = vld [vmem:[#allocation10 + $0x60] sm:$0xff]
    %v69 = vld [vmem:[#allocation10 + $0x68] sm:$0xff]
    %v70 = vld [vmem:[#allocation10 + $0x70] sm:$0xff]
    %v71 = vld [vmem:[#allocation10 + $0x78] sm:$0xff]
    %v72 = vld [vmem:[#allocation10 + $0x80] sm:$0xff]
    %v73 = vld [vmem:[#allocation10 + $0x88] sm:$0xff]
    %v74 = vld [vmem:[#allocation10 + $0x90] sm:$0xff]
    %v75 = vld [vmem:[#allocation10 + $0x98] sm:$0xff]
    %v76 = vld [vmem:[#allocation10 + $0xa0] sm:$0xff]
    %v77 = vld [vmem:[#allocation10 + $0xa8] sm:$0xff]
    %v78 = vld [vmem:[#allocation10 + $0xb0] sm:$0xff]
    %v79 = vld [vmem:[#allocation10 + $0xb8] sm:$0xff]
    %v80 = vld [vmem:[#allocation10 + $0xc0] sm:$0xff]
    %v81 = vld [vmem:[#allocation10 + $0xc8] sm:$0xff]
    %v82 = vld [vmem:[#allocation10 + $0xd0] sm:$0xff]
    %v83 = vld [vmem:[#allocation10 + $0xd8] sm:$0xff]
    %v84 = vld [vmem:[#allocation10 + $0xe0] sm:$0xff]
    %v85 = vld [vmem:[#allocation10 + $0xe8] sm:$0xff]
    %v86 = vld [vmem:[#allocation10 + $0xf0] sm:$0xff]
    %v87 = vld [vmem:[#allocation10 + $0xf8] sm:$0xff]
    %v88 = vld [vmem:[#allocation10 + $0x100] sm:$0xff]
    %v89 = vld [vmem:[#allocation10 + $0x108] sm:$0xff]
    %v90 = vld [vmem:[#allocation10 + $0x110] sm:$0xff]
    %v91 = vld [vmem:[#allocation10 + $0x118] sm:$0xff]
    %v92 = vld [vmem:[#allocation10 + $0x120] sm:$0xff]
    %v93 = vld [vmem:[#allocation10 + $0x128] sm:$0xff]
    %v94 = vld [vmem:[#allocation10 + $0x130] sm:$0xff]
    %v95 = vld [vmem:[#allocation10 + $0x138] sm:$0xff]
    %v96 = vld [vmem:[#allocation10 + $0x140] sm:$0xff]
    %v97 = vld [vmem:[#allocation10 + $0x148] sm:$0xff]
    %v98 = vld [vmem:[#allocation10 + $0x150] sm:$0xff]
    %v99 = vld [vmem:[#allocation10 + $0x158] sm:$0xff]
    %v100 = vld [vmem:[#allocation10 + $0x160] sm:$0xff]
    %v101 = vld [vmem:[#allocation10 + $0x168] sm:$0xff]
    %v102 = vld [vmem:[#allocation10 + $0x170] sm:$0xff]
    %v103 = vld [vmem:[#allocation10 + $0x178] sm:$0xff]
    %v104 = vld [vmem:[#allocation10 + $0x180] sm:$0xff]
    %v105 = vld [vmem:[#allocation10 + $0x188] sm:$0xff]
    %v106 = vld [vmem:[#allocation10 + $0x190] sm:$0xff]
    %v107 = vld [vmem:[#allocation10 + $0x198] sm:$0xff]
    %v108 = vld [vmem:[#allocation10 + $0x1a0] sm:$0xff]
    %v109 = vld [vmem:[#allocation10 + $0x1a8] sm:$0xff]
    %v110 = vld [vmem:[#allocation10 + $0x1b0] sm:$0xff]
    %v111 = vld [vmem:[#allocation10 + $0x1b8] sm:$0xff]
    %v112 = vld [vmem:[#allocation10 + $0x1c0] sm:$0xff]
    %v113 = vld [vmem:[#allocation10 + $0x1c8] sm:$0xff]
    %v114 = vld [vmem:[#allocation10 + $0x1d0] sm:$0xff]
    %v115 = vld [vmem:[#allocation10 + $0x1d8] sm:$0xff]
    %v116 = vld [vmem:[#allocation10 + $0x1e0] sm:$0xff]
    %v117 = vld [vmem:[#allocation10 + $0x1e8] sm:$0xff]
    %v118 = vld [vmem:[#allocation10 + $0x1f0] sm:$0xff]
    %v119 = vld [vmem:[#allocation10 + $0x1f8] sm:$0xff]
    %v120 = vld [vmem:[#allocation2] sm:$0x1]
    %v121 = vld [vmem:[#allocation3] sm:$0x1]
    %v122 = vld [vmem:[#allocation7] ss:$8 sm:$0xf]
    %123 = vmatprep.subr.mxu0 %v117
    %124 = vmatpush1.msra.mxu0 %v116
    %125 = vmatprep.subr.mxu0 %v113
    %126 = vmatpush1.msra.mxu0 %v112
    %127 = vmatprep.subr.mxu0 %v109
    %128 = vmatpush1.msra.mxu0 %v108
    %129 = vmatprep.subr.mxu0 %v105
    %130 = vmatpush1.msra.mxu0 %v104
    %131 = vmatprep.subr.mxu0 %v101
    %132 = vmatpush1.msra.mxu0 %v100
    %133 = vmatprep.subr.mxu0 %v97
    %134 = vmatpush1.msra.mxu0 %v96
    %135 = vmatprep.subr.mxu0 %v93
    %136 = vmatpush1.msra.mxu0 %v92
    %137 = vmatprep.subr.mxu0 %v89
    %138 = vmatpush1.msra.mxu0 %v88
    %139 = vmatprep.subr.mxu0 %v85
    %140 = vmatpush1.msra.mxu0 %v84
    %141 = vmatprep.subr.mxu0 %v81
    %142 = vmatpush1.msra.mxu0 %v80
    %143 = vmatprep.subr.mxu0 %v77
    %144 = vmatpush1.msra.mxu0 %v76
    %145 = vmatprep.subr.mxu0 %v73
    %146 = vmatpush1.msra.mxu0 %v72
    %147 = vmatprep.subr.mxu0 %v69
    %148 = vmatpush1.msra.mxu0 %v68
    %149 = vmatprep.subr.mxu0 %v65
    %150 = vmatpush1.msra.mxu0 %v64
    %151 = vmatprep.subr.mxu0 %v61
    %152 = vmatpush1.msra.mxu0 %v60
    %153 = vmatprep.subr.mxu0 %v57
    %154 = vmatpush1.msra.mxu0 %v56
    %155 = vmatprep.subr.mxu0 0.0
    %156 = vmatpush2.msra.mxu0 0.0
    %157 = vmatprep.subr.mxu0 0.0
    %158 = vmatpush2.msra.mxu0 0.0
    %159 = vmatprep.subr.mxu0 0.0
    %160 = vmatpush2.msra.mxu0 0.0
    %161 = vmatprep.subr.mxu0 0.0
    %162 = vmatpush2.msra.mxu0 0.0
    %163 = vmatprep.subr.mxu0 0.0
    %164 = vmatpush2.msra.mxu0 0.0
    %165 = vmatprep.subr.mxu0 0.0
    %166 = vmatpush2.msra.mxu0 0.0
    %167 = vmatprep.subr.mxu0 0.0
    %168 = vmatpush2.msra.mxu0 0.0
    %169 = vmatprep.subr.mxu0 0.0
    %170 = vmatpush2.msra.mxu0 0.0
    %171 = vmatprep.subr.mxu0 0.0
    %172 = vmatpush2.msra.mxu0 0.0
    %173 = vmatprep.subr.mxu0 0.0
    %174 = vmatpush2.msra.mxu0 0.0
    %175 = vmatprep.subr.mxu0 0.0
    %176 = vmatpush2.msra.mxu0 0.0
    %177 = vmatprep.subr.mxu0 0.0
    %178 = vmatpush2.msra.mxu0 0.0
    %179 = vmatprep.subr.mxu0 0.0
    %180 = vmatpush2.msra.mxu0 0.0
    %181 = vmatprep.subr.mxu0 0.0
    %182 = vmatpush2.msra.mxu0 0.0
    %183 = vmatprep.subr.mxu0 0.0
    %184 = vmatpush2.msra.mxu0 0.0
    %185 = vmatprep.subr.mxu0 0.0
    %186 = vmatpush2.msra.mxu0 0.0
    %187 = vmatprep.mubr.f32.mxu0 0.0
    %188 = vmatmul.mubr.f32.gmra.mxu0 %v120
    %v189 = vpop.f32.mrf.mxu0
    %v190 = vadd.f32 0.0, %v189
    %v191 = vpop.f32.mrf.mxu0
    %v192 = vadd.f32 0.0, %v191
    %193 = vdwg.mxu0
    %194 = vmatprep.subr.mxu0 %v119
    %195 = vmatpush1.msra.mxu0 %v118
    %196 = vmatprep.subr.mxu0 %v115
    %197 = vmatpush1.msra.mxu0 %v114
    %198 = vmatprep.subr.mxu0 %v111
    %199 = vmatpush1.msra.mxu0 %v110
    %200 = vmatprep.subr.mxu0 %v107
    %201 = vmatpush1.msra.mxu0 %v106
    %202 = vmatprep.subr.mxu0 %v103
    %203 = vmatpush1.msra.mxu0 %v102
    %204 = vmatprep.subr.mxu0 %v99
    %205 = vmatpush1.msra.mxu0 %v98
    %206 = vmatprep.subr.mxu0 %v95
    %207 = vmatpush1.msra.mxu0 %v94
    %208 = vmatprep.subr.mxu0 %v91
    %209 = vmatpush1.msra.mxu0 %v90
    %210 = vmatprep.subr.mxu0 %v87
    %211 = vmatpush1.msra.mxu0 %v86
    %212 = vmatprep.subr.mxu0 %v83
    %213 = vmatpush1.msra.mxu0 %v82
    %214 = vmatprep.subr.mxu0 %v79
    %215 = vmatpush1.msra.mxu0 %v78
    %216 = vmatprep.subr.mxu0 %v75
    %217 = vmatpush1.msra.mxu0 %v74
    %218 = vmatprep.subr.mxu0 %v71
    %219 = vmatpush1.msra.mxu0 %v70
    %220 = vmatprep.subr.mxu0 %v67
    %221 = vmatpush1.msra.mxu0 %v66
    %222 = vmatprep.subr.mxu0 %v63
    %223 = vmatpush1.msra.mxu0 %v62
    %224 = vmatprep.subr.mxu0 %v59
    %225 = vmatpush1.msra.mxu0 %v58
    %226 = vmatprep.subr.mxu0 0.0
    %227 = vmatpush2.msra.mxu0 0.0
    %228 = vmatprep.subr.mxu0 0.0
    %229 = vmatpush2.msra.mxu0 0.0
    %230 = vmatprep.subr.mxu0 0.0
    %231 = vmatpush2.msra.mxu0 0.0
    %232 = vmatprep.subr.mxu0 0.0
    %233 = vmatpush2.msra.mxu0 0.0
    %234 = vmatprep.subr.mxu0 0.0
    %235 = vmatpush2.msra.mxu0 0.0
    %236 = vmatprep.subr.mxu0 0.0
    %237 = vmatpush2.msra.mxu0 0.0
    %238 = vmatprep.subr.mxu0 0.0
    %239 = vmatpush2.msra.mxu0 0.0
    %240 = vmatprep.subr.mxu0 0.0
    %241 = vmatpush2.msra.mxu0 0.0
    %242 = vmatprep.subr.mxu0 0.0
    %243 = vmatpush2.msra.mxu0 0.0
    %244 = vmatprep.subr.mxu0 0.0
    %245 = vmatpush2.msra.mxu0 0.0
    %246 = vmatprep.subr.mxu0 0.0
    %247 = vmatpush2.msra.mxu0 0.0
    %248 = vmatprep.subr.mxu0 0.0
    %249 = vmatpush2.msra.mxu0 0.0
    %250 = vmatprep.subr.mxu0 0.0
    %251 = vmatpush2.msra.mxu0 0.0
    %252 = vmatprep.subr.mxu0 0.0
    %253 = vmatpush2.msra.mxu0 0.0
    %254 = vmatprep.subr.mxu0 0.0
    %255 = vmatpush2.msra.mxu0 0.0
    %256 = vmatprep.subr.mxu0 0.0
    %257 = vmatpush2.msra.mxu0 0.0
    %258 = vmatprep.mubr.f32.mxu0 0.0
    %259 = vmatmul.mubr.f32.gmra.mxu0 %v120
    %v260 = vpop.f32.mrf.mxu0
    %v261 = vadd.f32 0.0, %v260
    %v262 = vpop.f32.mrf.mxu0
    %v263 = vadd.f32 0.0, %v262
    %264 = vdwg.mxu0
    %v269 = vcombine.low %v190, %v192
    %v270 = vcombine.low %v261, %v263
    %v272 = vunpack.c.l.s4 1966171168
    %v273 = vunpack.c.0.s8 %v272
    %v274 = vlaneseq
    %v275 = vshrl.u32 %v274, 7
    %v276 = vsub.s32 %v273, %v275
    %v277 = vrot.slane %v269, %v276
    %v279 = vunpack.c.l.s4 1966171168
    %v280 = vunpack.c.0.s8 %v279
    %v281 = vlaneseq
    %v282 = vshrl.u32 %v281, 7
    %v283 = vsub.s32 %v280, %v282
    %v284 = vrot.slane %v270, %v283
    %v285 = vcombine.low %v277, %v284
    %v287 = vunpack.c.l.s4 1966171168
    %v288 = vunpack.c.0.s8 %v287
    %v289 = vlaneseq
    %v290 = vshrl.u32 %v289, 7
    %v291 = vsub.s32 %v288, %v290
    %v292 = vrot.slane %v285, %v291
    %v294 = vadd.f32 %v122, %v292
    %v295 = vxor.u32 %v294, 2147483648
    %v296 = vmul.f32 %v295, 1.442695
    %v297 = vpow.pop %v296
    %v298 = vadd.f32 %v297, 1.0
    %v299 = vrcp.pop %v298
    %v300 = vmul.f32 1.0, %v299
    %v302 = vrot.slane %v294, 1
    %v304 = vxor.u32 %v302, 2147483648
    %v305 = vmul.f32 %v304, 1.442695
    %v306 = vpow.pop %v305
    %v307 = vadd.f32 %v306, 1.0
    %v308 = vrcp.pop %v307
    %v309 = vmul.f32 1.0, %v308
    %v310 = vrot.slane %v294, 2
    %v312 = vtanh.pop %v310
    %v313 = vrot.slane %v294, 3
    %v315 = vxor.u32 %v313, 2147483648
    %v316 = vmul.f32 %v315, 1.442695
    %v317 = vpow.pop %v316
    %v318 = vadd.f32 %v317, 1.0
    %v319 = vrcp.pop %v318
    %v320 = vmul.f32 1.0, %v319
    %v321 = vmul.f32 %v309, %v121
    %v322 = vmul.f32 %v300, %v312
    %v323 = vadd.f32 %v321, %v322
    %v324 = vtanh.pop %v323
    %v325 = vmul.f32 %v320, %v324
    %p326 = scmp.lt.s32.totalorder %s49, %s48
    %s327 = scalar_select %p326, 1, 0
    %v328 = vstv %s327
    %vm329 = vcmp.eq.s32.totalorder %v328, 1
    %v330 = vsel %vm329, %v325, %v120
    %v331 = vsel %vm329, %v323, %v121
    %s332 = scalar_lea.vmem [#allocation7], 1
    %v333 = vld [vmem:[%s332] ss:$8 sm:$0xf]
    %334 = vmatprep.subr.mxu0 %v117
    %335 = vmatpush1.msra.mxu0 %v116
    %336 = vmatprep.subr.mxu0 %v113
    %337 = vmatpush1.msra.mxu0 %v112
    %338 = vmatprep.subr.mxu0 %v109
    %339 = vmatpush1.msra.mxu0 %v108
    %340 = vmatprep.subr.mxu0 %v105
    %341 = vmatpush1.msra.mxu0 %v104
    %342 = vmatprep.subr.mxu0 %v101
    %343 = vmatpush1.msra.mxu0 %v100
    %344 = vmatprep.subr.mxu0 %v97
    %345 = vmatpush1.msra.mxu0 %v96
    %346 = vmatprep.subr.mxu0 %v93
    %347 = vmatpush1.msra.mxu0 %v92
    %348 = vmatprep.subr.mxu0 %v89
    %349 = vmatpush1.msra.mxu0 %v88
    %350 = vmatprep.subr.mxu0 %v85
    %351 = vmatpush1.msra.mxu0 %v84
    %352 = vmatprep.subr.mxu0 %v81
    %353 = vmatpush1.msra.mxu0 %v80
    %354 = vmatprep.subr.mxu0 %v77
    %355 = vmatpush1.msra.mxu0 %v76
    %356 = vmatprep.subr.mxu0 %v73
    %357 = vmatpush1.msra.mxu0 %v72
    %358 = vmatprep.subr.mxu0 %v69
    %359 = vmatpush1.msra.mxu0 %v68
    %360 = vmatprep.subr.mxu0 %v65
    %361 = vmatpush1.msra.mxu0 %v64
    %362 = vmatprep.subr.mxu0 %v61
    %363 = vmatpush1.msra.mxu0 %v60
    %364 = vmatprep.subr.mxu0 %v57
    %365 = vmatpush1.msra.mxu0 %v56
    %366 = vmatprep.subr.mxu0 0.0
    %367 = vmatpush2.msra.mxu0 0.0
    %368 = vmatprep.subr.mxu0 0.0
    %369 = vmatpush2.msra.mxu0 0.0
    %370 = vmatprep.subr.mxu0 0.0
    %371 = vmatpush2.msra.mxu0 0.0
    %372 = vmatprep.subr.mxu0 0.0
    %373 = vmatpush2.msra.mxu0 0.0
    %374 = vmatprep.subr.mxu0 0.0
    %375 = vmatpush2.msra.mxu0 0.0
    %376 = vmatprep.subr.mxu0 0.0
    %377 = vmatpush2.msra.mxu0 0.0
    %378 = vmatprep.subr.mxu0 0.0
    %379 = vmatpush2.msra.mxu0 0.0
    %380 = vmatprep.subr.mxu0 0.0
    %381 = vmatpush2.msra.mxu0 0.0
    %382 = vmatprep.subr.mxu0 0.0
    %383 = vmatpush2.msra.mxu0 0.0
    %384 = vmatprep.subr.mxu0 0.0
    %385 = vmatpush2.msra.mxu0 0.0
    %386 = vmatprep.subr.mxu0 0.0
    %387 = vmatpush2.msra.mxu0 0.0
    %388 = vmatprep.subr.mxu0 0.0
    %389 = vmatpush2.msra.mxu0 0.0
    %390 = vmatprep.subr.mxu0 0.0
    %391 = vmatpush2.msra.mxu0 0.0
    %392 = vmatprep.subr.mxu0 0.0
    %393 = vmatpush2.msra.mxu0 0.0
    %394 = vmatprep.subr.mxu0 0.0
    %395 = vmatpush2.msra.mxu0 0.0
    %396 = vmatprep.subr.mxu0 0.0
    %397 = vmatpush2.msra.mxu0 0.0
    %398 = vmatprep.mubr.f32.mxu0 0.0
    %399 = vmatmul.mubr.f32.gmra.mxu0 %v330
    %v400 = vpop.f32.mrf.mxu0
    %v401 = vadd.f32 0.0, %v400
    %v402 = vpop.f32.mrf.mxu0
    %v403 = vadd.f32 0.0, %v402
    %404 = vdwg.mxu0
    %405 = vmatprep.subr.mxu0 %v119
    %406 = vmatpush1.msra.mxu0 %v118
    %407 = vmatprep.subr.mxu0 %v115
    %408 = vmatpush1.msra.mxu0 %v114
    %409 = vmatprep.subr.mxu0 %v111
    %410 = vmatpush1.msra.mxu0 %v110
    %411 = vmatprep.subr.mxu0 %v107
    %412 = vmatpush1.msra.mxu0 %v106
    %413 = vmatprep.subr.mxu0 %v103
    %414 = vmatpush1.msra.mxu0 %v102
    %415 = vmatprep.subr.mxu0 %v99
    %416 = vmatpush1.msra.mxu0 %v98
    %417 = vmatprep.subr.mxu0 %v95
    %418 = vmatpush1.msra.mxu0 %v94
    %419 = vmatprep.subr.mxu0 %v91
    %420 = vmatpush1.msra.mxu0 %v90
    %421 = vmatprep.subr.mxu0 %v87
    %422 = vmatpush1.msra.mxu0 %v86
    %423 = vmatprep.subr.mxu0 %v83
    %424 = vmatpush1.msra.mxu0 %v82
    %425 = vmatprep.subr.mxu0 %v79
    %426 = vmatpush1.msra.mxu0 %v78
    %427 = vmatprep.subr.mxu0 %v75
    %428 = vmatpush1.msra.mxu0 %v74
    %429 = vmatprep.subr.mxu0 %v71
    %430 = vmatpush1.msra.mxu0 %v70
    %431 = vmatprep.subr.mxu0 %v67
    %432 = vmatpush1.msra.mxu0 %v66
    %433 = vmatprep.subr.mxu0 %v63
    %434 = vmatpush1.msra.mxu0 %v62
    %435 = vmatprep.subr.mxu0 %v59
    %436 = vmatpush1.msra.mxu0 %v58
    %437 = vmatprep.subr.mxu0 0.0
    %438 = vmatpush2.msra.mxu0 0.0
    %439 = vmatprep.subr.mxu0 0.0
    %440 = vmatpush2.msra.mxu0 0.0
    %441 = vmatprep.subr.mxu0 0.0
    %442 = vmatpush2.msra.mxu0 0.0
    %443 = vmatprep.subr.mxu0 0.0
    %444 = vmatpush2.msra.mxu0 0.0
    %445 = vmatprep.subr.mxu0 0.0
    %446 = vmatpush2.msra.mxu0 0.0
    %447 = vmatprep.subr.mxu0 0.0
    %448 = vmatpush2.msra.mxu0 0.0
    %449 = vmatprep.subr.mxu0 0.0
    %450 = vmatpush2.msra.mxu0 0.0
    %451 = vmatprep.subr.mxu0 0.0
    %452 = vmatpush2.msra.mxu0 0.0
    %453 = vmatprep.subr.mxu0 0.0
    %454 = vmatpush2.msra.mxu0 0.0
    %455 = vmatprep.subr.mxu0 0.0
    %456 = vmatpush2.msra.mxu0 0.0
    %457 = vmatprep.subr.mxu0 0.0
    %458 = vmatpush2.msra.mxu0 0.0
    %459 = vmatprep.subr.mxu0 0.0
    %460 = vmatpush2.msra.mxu0 0.0
    %461 = vmatprep.subr.mxu0 0.0
    %462 = vmatpush2.msra.mxu0 0.0
    %463 = vmatprep.subr.mxu0 0.0
    %464 = vmatpush2.msra.mxu0 0.0
    %465 = vmatprep.subr.mxu0 0.0
    %466 = vmatpush2.msra.mxu0 0.0
    %467 = vmatprep.subr.mxu0 0.0
    %468 = vmatpush2.msra.mxu0 0.0
    %469 = vmatprep.mubr.f32.mxu0 0.0
    %470 = vmatmul.mubr.f32.gmra.mxu0 %v330
    %v471 = vpop.f32.mrf.mxu0
    %v472 = vadd.f32 0.0, %v471
    %v473 = vpop.f32.mrf.mxu0
    %v474 = vadd.f32 0.0, %v473
    %475 = vdwg.mxu0
    %v480 = vcombine.low %v401, %v403
    %v481 = vcombine.low %v472, %v474
    %v483 = vunpack.c.l.s4 1966171168
    %v484 = vunpack.c.0.s8 %v483
    %v485 = vlaneseq
    %v486 = vshrl.u32 %v485, 7
    %v487 = vsub.s32 %v484, %v486
    %v488 = vrot.slane %v480, %v487
    %v490 = vunpack.c.l.s4 1966171168
    %v491 = vunpack.c.0.s8 %v490
    %v492 = vlaneseq
    %v493 = vshrl.u32 %v492, 7
    %v494 = vsub.s32 %v491, %v493
    %v495 = vrot.slane %v481, %v494
    %v496 = vcombine.low %v488, %v495
    %v498 = vunpack.c.l.s4 1966171168
    %v499 = vunpack.c.0.s8 %v498
    %v500 = vlaneseq
    %v501 = vshrl.u32 %v500, 7
    %v502 = vsub.s32 %v499, %v501
    %v503 = vrot.slane %v496, %v502
    %v505 = vadd.f32 %v333, %v503
    %v506 = vxor.u32 %v505, 2147483648
    %v507 = vmul.f32 %v506, 1.442695
    %v508 = vpow.pop %v507
    %v509 = vadd.f32 %v508, 1.0
    %v510 = vrcp.pop %v509
    %v511 = vmul.f32 1.0, %v510
    %v513 = vrot.slane %v505, 1
    %v515 = vxor.u32 %v513, 2147483648
    %v516 = vmul.f32 %v515, 1.442695
    %v517 = vpow.pop %v516
    %v518 = vadd.f32 %v517, 1.0
    %v519 = vrcp.pop %v518
    %v520 = vmul.f32 1.0, %v519
    %v521 = vrot.slane %v505, 2
    %v523 = vtanh.pop %v521
    %v524 = vrot.slane %v505, 3
    %v526 = vxor.u32 %v524, 2147483648
    %v527 = vmul.f32 %v526, 1.442695
    %v528 = vpow.pop %v527
    %v529 = vadd.f32 %v528, 1.0
    %v530 = vrcp.pop %v529
    %v531 = vmul.f32 1.0, %v530
    %v532 = vmul.f32 %v520, %v331
    %v533 = vmul.f32 %v511, %v523
    %v534 = vadd.f32 %v532, %v533
    %v535 = vtanh.pop %v534
    %v536 = vmul.f32 %v531, %v535
    %s537 = sadd.s32 %s49, 1
    %p538 = scmp.lt.s32.totalorder %s537, %s48
    %s539 = scalar_select %p538, 1, 0
    %v540 = vstv %s539
    %vm541 = vcmp.eq.s32.totalorder %v540, 1
    %v542 = vsel %vm541, %v536, %v330
    %v543 = vsel %vm541, %v534, %v331
    %s544 = scalar_lea.vmem [#allocation7], 2
    %v545 = vld [vmem:[%s544] ss:$8 sm:$0xf]
    %546 = vmatprep.subr.mxu0 %v117
    %547 = vmatpush1.msra.mxu0 %v116
    %548 = vmatprep.subr.mxu0 %v113
    %549 = vmatpush1.msra.mxu0 %v112
    %550 = vmatprep.subr.mxu0 %v109
    %551 = vmatpush1.msra.mxu0 %v108
    %552 = vmatprep.subr.mxu0 %v105
    %553 = vmatpush1.msra.mxu0 %v104
    %554 = vmatprep.subr.mxu0 %v101
    %555 = vmatpush1.msra.mxu0 %v100
    %556 = vmatprep.subr.mxu0 %v97
    %557 = vmatpush1.msra.mxu0 %v96
    %558 = vmatprep.subr.mxu0 %v93
    %559 = vmatpush1.msra.mxu0 %v92
    %560 = vmatprep.subr.mxu0 %v89
    %561 = vmatpush1.msra.mxu0 %v88
    %562 = vmatprep.subr.mxu0 %v85
    %563 = vmatpush1.msra.mxu0 %v84
    %564 = vmatprep.subr.mxu0 %v81
    %565 = vmatpush1.msra.mxu0 %v80
    %566 = vmatprep.subr.mxu0 %v77
    %567 = vmatpush1.msra.mxu0 %v76
    %568 = vmatprep.subr.mxu0 %v73
    %569 = vmatpush1.msra.mxu0 %v72
    %570 = vmatprep.subr.mxu0 %v69
    %571 = vmatpush1.msra.mxu0 %v68
    %572 = vmatprep.subr.mxu0 %v65
    %573 = vmatpush1.msra.mxu0 %v64
    %574 = vmatprep.subr.mxu0 %v61
    %575 = vmatpush1.msra.mxu0 %v60
    %576 = vmatprep.subr.mxu0 %v57
    %577 = vmatpush1.msra.mxu0 %v56
    %578 = vmatprep.subr.mxu0 0.0
    %579 = vmatpush2.msra.mxu0 0.0
    %580 = vmatprep.subr.mxu0 0.0
    %581 = vmatpush2.msra.mxu0 0.0
    %582 = vmatprep.subr.mxu0 0.0
    %583 = vmatpush2.msra.mxu0 0.0
    %584 = vmatprep.subr.mxu0 0.0
    %585 = vmatpush2.msra.mxu0 0.0
    %586 = vmatprep.subr.mxu0 0.0
    %587 = vmatpush2.msra.mxu0 0.0
    %588 = vmatprep.subr.mxu0 0.0
    %589 = vmatpush2.msra.mxu0 0.0
    %590 = vmatprep.subr.mxu0 0.0
    %591 = vmatpush2.msra.mxu0 0.0
    %592 = vmatprep.subr.mxu0 0.0
    %593 = vmatpush2.msra.mxu0 0.0
    %594 = vmatprep.subr.mxu0 0.0
    %595 = vmatpush2.msra.mxu0 0.0
    %596 = vmatprep.subr.mxu0 0.0
    %597 = vmatpush2.msra.mxu0 0.0
    %598 = vmatprep.subr.mxu0 0.0
    %599 = vmatpush2.msra.mxu0 0.0
    %600 = vmatprep.subr.mxu0 0.0
    %601 = vmatpush2.msra.mxu0 0.0
    %602 = vmatprep.subr.mxu0 0.0
    %603 = vmatpush2.msra.mxu0 0.0
    %604 = vmatprep.subr.mxu0 0.0
    %605 = vmatpush2.msra.mxu0 0.0
    %606 = vmatprep.subr.mxu0 0.0
    %607 = vmatpush2.msra.mxu0 0.0
    %608 = vmatprep.subr.mxu0 0.0
    %609 = vmatpush2.msra.mxu0 0.0
    %610 = vmatprep.mubr.f32.mxu0 0.0
    %611 = vmatmul.mubr.f32.gmra.mxu0 %v542
    %v612 = vpop.f32.mrf.mxu0
    %v613 = vadd.f32 0.0, %v612
    %v614 = vpop.f32.mrf.mxu0
    %v615 = vadd.f32 0.0, %v614
    %616 = vdwg.mxu0
    %617 = vmatprep.subr.mxu0 %v119
    %618 = vmatpush1.msra.mxu0 %v118
    %619 = vmatprep.subr.mxu0 %v115
    %620 = vmatpush1.msra.mxu0 %v114
    %621 = vmatprep.subr.mxu0 %v111
    %622 = vmatpush1.msra.mxu0 %v110
    %623 = vmatprep.subr.mxu0 %v107
    %624 = vmatpush1.msra.mxu0 %v106
    %625 = vmatprep.subr.mxu0 %v103
    %626 = vmatpush1.msra.mxu0 %v102
    %627 = vmatprep.subr.mxu0 %v99
    %628 = vmatpush1.msra.mxu0 %v98
    %629 = vmatprep.subr.mxu0 %v95
    %630 = vmatpush1.msra.mxu0 %v94
    %631 = vmatprep.subr.mxu0 %v91
    %632 = vmatpush1.msra.mxu0 %v90
    %633 = vmatprep.subr.mxu0 %v87
    %634 = vmatpush1.msra.mxu0 %v86
    %635 = vmatprep.subr.mxu0 %v83
    %636 = vmatpush1.msra.mxu0 %v82
    %637 = vmatprep.subr.mxu0 %v79
    %638 = vmatpush1.msra.mxu0 %v78
    %639 = vmatprep.subr.mxu0 %v75
    %640 = vmatpush1.msra.mxu0 %v74
    %641 = vmatprep.subr.mxu0 %v71
    %642 = vmatpush1.msra.mxu0 %v70
    %643 = vmatprep.subr.mxu0 %v67
    %644 = vmatpush1.msra.mxu0 %v66
    %645 = vmatprep.subr.mxu0 %v63
    %646 = vmatpush1.msra.mxu0 %v62
    %647 = vmatprep.subr.mxu0 %v59
    %648 = vmatpush1.msra.mxu0 %v58
    %649 = vmatprep.subr.mxu0 0.0
    %650 = vmatpush2.msra.mxu0 0.0
    %651 = vmatprep.subr.mxu0 0.0
    %652 = vmatpush2.msra.mxu0 0.0
    %653 = vmatprep.subr.mxu0 0.0
    %654 = vmatpush2.msra.mxu0 0.0
    %655 = vmatprep.subr.mxu0 0.0
    %656 = vmatpush2.msra.mxu0 0.0
    %657 = vmatprep.subr.mxu0 0.0
    %658 = vmatpush2.msra.mxu0 0.0
    %659 = vmatprep.subr.mxu0 0.0
    %660 = vmatpush2.msra.mxu0 0.0
    %661 = vmatprep.subr.mxu0 0.0
    %662 = vmatpush2.msra.mxu0 0.0
    %663 = vmatprep.subr.mxu0 0.0
    %664 = vmatpush2.msra.mxu0 0.0
    %665 = vmatprep.subr.mxu0 0.0
    %666 = vmatpush2.msra.mxu0 0.0
    %667 = vmatprep.subr.mxu0 0.0
    %668 = vmatpush2.msra.mxu0 0.0
    %669 = vmatprep.subr.mxu0 0.0
    %670 = vmatpush2.msra.mxu0 0.0
    %671 = vmatprep.subr.mxu0 0.0
    %672 = vmatpush2.msra.mxu0 0.0
    %673 = vmatprep.subr.mxu0 0.0
    %674 = vmatpush2.msra.mxu0 0.0
    %675 = vmatprep.subr.mxu0 0.0
    %676 = vmatpush2.msra.mxu0 0.0
    %677 = vmatprep.subr.mxu0 0.0
    %678 = vmatpush2.msra.mxu0 0.0
    %679 = vmatprep.subr.mxu0 0.0
    %680 = vmatpush2.msra.mxu0 0.0
    %681 = vmatprep.mubr.f32.mxu0 0.0
    %682 = vmatmul.mubr.f32.gmra.mxu0 %v542
    %v683 = vpop.f32.mrf.mxu0
    %v684 = vadd.f32 0.0, %v683
    %v685 = vpop.f32.mrf.mxu0
    %v686 = vadd.f32 0.0, %v685
    %687 = vdwg.mxu0
    %v692 = vcombine.low %v613, %v615
    %v693 = vcombine.low %v684, %v686
    %v695 = vunpack.c.l.s4 1966171168
    %v696 = vunpack.c.0.s8 %v695
    %v697 = vlaneseq
    %v698 = vshrl.u32 %v697, 7
    %v699 = vsub.s32 %v696, %v698
    %v700 = vrot.slane %v692, %v699
    %v702 = vunpack.c.l.s4 1966171168
    %v703 = vunpack.c.0.s8 %v702
    %v704 = vlaneseq
    %v705 = vshrl.u32 %v704, 7
    %v706 = vsub.s32 %v703, %v705
    %v707 = vrot.slane %v693, %v706
    %v708 = vcombine.low %v700, %v707
    %v710 = vunpack.c.l.s4 1966171168
    %v711 = vunpack.c.0.s8 %v710
    %v712 = vlaneseq
    %v713 = vshrl.u32 %v712, 7
    %v714 = vsub.s32 %v711, %v713
    %v715 = vrot.slane %v708, %v714
    %v717 = vadd.f32 %v545, %v715
    %v718 = vxor.u32 %v717, 2147483648
    %v719 = vmul.f32 %v718, 1.442695
    %v720 = vpow.pop %v719
    %v721 = vadd.f32 %v720, 1.0
    %v722 = vrcp.pop %v721
    %v723 = vmul.f32 1.0, %v722
    %v725 = vrot.slane %v717, 1
    %v727 = vxor.u32 %v725, 2147483648
    %v728 = vmul.f32 %v727, 1.442695
    %v729 = vpow.pop %v728
    %v730 = vadd.f32 %v729, 1.0
    %v731 = vrcp.pop %v730
    %v732 = vmul.f32 1.0, %v731
    %v733 = vrot.slane %v717, 2
    %v735 = vtanh.pop %v733
    %v736 = vrot.slane %v717, 3
    %v738 = vxor.u32 %v736, 2147483648
    %v739 = vmul.f32 %v738, 1.442695
    %v740 = vpow.pop %v739
    %v741 = vadd.f32 %v740, 1.0
    %v742 = vrcp.pop %v741
    %v743 = vmul.f32 1.0, %v742
    %v744 = vmul.f32 %v732, %v543
    %v745 = vmul.f32 %v723, %v735
    %v746 = vadd.f32 %v744, %v745
    %v747 = vtanh.pop %v746
    %v748 = vmul.f32 %v743, %v747
    %s749 = sadd.s32 %s49, 2
    %p750 = scmp.lt.s32.totalorder %s749, %s48
    %s751 = scalar_select %p750, 1, 0
    %v752 = vstv %s751
    %vm753 = vcmp.eq.s32.totalorder %v752, 1
    %v754 = vsel %vm753, %v748, %v542
    %v755 = vsel %vm753, %v746, %v543
    %s756 = scalar_lea.vmem [#allocation7], 3
    %v757 = vld [vmem:[%s756] ss:$8 sm:$0xf]
    %758 = vmatprep.subr.mxu0 %v117
    %759 = vmatpush1.msra.mxu0 %v116
    %760 = vmatprep.subr.mxu0 %v113
    %761 = vmatpush1.msra.mxu0 %v112
    %762 = vmatprep.subr.mxu0 %v109
    %763 = vmatpush1.msra.mxu0 %v108
    %764 = vmatprep.subr.mxu0 %v105
    %765 = vmatpush1.msra.mxu0 %v104
    %766 = vmatprep.subr.mxu0 %v101
    %767 = vmatpush1.msra.mxu0 %v100
    %768 = vmatprep.subr.mxu0 %v97
    %769 = vmatpush1.msra.mxu0 %v96
    %770 = vmatprep.subr.mxu0 %v93
    %771 = vmatpush1.msra.mxu0 %v92
    %772 = vmatprep.subr.mxu0 %v89
    %773 = vmatpush1.msra.mxu0 %v88
    %774 = vmatprep.subr.mxu0 %v85
    %775 = vmatpush1.msra.mxu0 %v84
    %776 = vmatprep.subr.mxu0 %v81
    %777 = vmatpush1.msra.mxu0 %v80
    %778 = vmatprep.subr.mxu0 %v77
    %779 = vmatpush1.msra.mxu0 %v76
    %780 = vmatprep.subr.mxu0 %v73
    %781 = vmatpush1.msra.mxu0 %v72
    %782 = vmatprep.subr.mxu0 %v69
    %783 = vmatpush1.msra.mxu0 %v68
    %784 = vmatprep.subr.mxu0 %v65
    %785 = vmatpush1.msra.mxu0 %v64
    %786 = vmatprep.subr.mxu0 %v61
    %787 = vmatpush1.msra.mxu0 %v60
    %788 = vmatprep.subr.mxu0 %v57
    %789 = vmatpush1.msra.mxu0 %v56
    %790 = vmatprep.subr.mxu0 0.0
    %791 = vmatpush2.msra.mxu0 0.0
    %792 = vmatprep.subr.mxu0 0.0
    %793 = vmatpush2.msra.mxu0 0.0
    %794 = vmatprep.subr.mxu0 0.0
    %795 = vmatpush2.msra.mxu0 0.0
    %796 = vmatprep.subr.mxu0 0.0
    %797 = vmatpush2.msra.mxu0 0.0
    %798 = vmatprep.subr.mxu0 0.0
    %799 = vmatpush2.msra.mxu0 0.0
    %800 = vmatprep.subr.mxu0 0.0
    %801 = vmatpush2.msra.mxu0 0.0
    %802 = vmatprep.subr.mxu0 0.0
    %803 = vmatpush2.msra.mxu0 0.0
    %804 = vmatprep.subr.mxu0 0.0
    %805 = vmatpush2.msra.mxu0 0.0
    %806 = vmatprep.subr.mxu0 0.0
    %807 = vmatpush2.msra.mxu0 0.0
    %808 = vmatprep.subr.mxu0 0.0
    %809 = vmatpush2.msra.mxu0 0.0
    %810 = vmatprep.subr.mxu0 0.0
    %811 = vmatpush2.msra.mxu0 0.0
    %812 = vmatprep.subr.mxu0 0.0
    %813 = vmatpush2.msra.mxu0 0.0
    %814 = vmatprep.subr.mxu0 0.0
    %815 = vmatpush2.msra.mxu0 0.0
    %816 = vmatprep.subr.mxu0 0.0
    %817 = vmatpush2.msra.mxu0 0.0
    %818 = vmatprep.subr.mxu0 0.0
    %819 = vmatpush2.msra.mxu0 0.0
    %820 = vmatprep.subr.mxu0 0.0
    %821 = vmatpush2.msra.mxu0 0.0
    %822 = vmatprep.mubr.f32.mxu0 0.0
    %823 = vmatmul.mubr.f32.gmra.mxu0 %v754
    %v824 = vpop.f32.mrf.mxu0
    %v825 = vadd.f32 0.0, %v824
    %v826 = vpop.f32.mrf.mxu0
    %v827 = vadd.f32 0.0, %v826
    %828 = vdwg.mxu0
    %829 = vmatprep.subr.mxu0 %v119
    %830 = vmatpush1.msra.mxu0 %v118
    %831 = vmatprep.subr.mxu0 %v115
    %832 = vmatpush1.msra.mxu0 %v114
    %833 = vmatprep.subr.mxu0 %v111
    %834 = vmatpush1.msra.mxu0 %v110
    %835 = vmatprep.subr.mxu0 %v107
    %836 = vmatpush1.msra.mxu0 %v106
    %837 = vmatprep.subr.mxu0 %v103
    %838 = vmatpush1.msra.mxu0 %v102
    %839 = vmatprep.subr.mxu0 %v99
    %840 = vmatpush1.msra.mxu0 %v98
    %841 = vmatprep.subr.mxu0 %v95
    %842 = vmatpush1.msra.mxu0 %v94
    %843 = vmatprep.subr.mxu0 %v91
    %844 = vmatpush1.msra.mxu0 %v90
    %845 = vmatprep.subr.mxu0 %v87
    %846 = vmatpush1.msra.mxu0 %v86
    %847 = vmatprep.subr.mxu0 %v83
    %848 = vmatpush1.msra.mxu0 %v82
    %849 = vmatprep.subr.mxu0 %v79
    %850 = vmatpush1.msra.mxu0 %v78
    %851 = vmatprep.subr.mxu0 %v75
    %852 = vmatpush1.msra.mxu0 %v74
    %853 = vmatprep.subr.mxu0 %v71
    %854 = vmatpush1.msra.mxu0 %v70
    %855 = vmatprep.subr.mxu0 %v67
    %856 = vmatpush1.msra.mxu0 %v66
    %857 = vmatprep.subr.mxu0 %v63
    %858 = vmatpush1.msra.mxu0 %v62
    %859 = vmatprep.subr.mxu0 %v59
    %860 = vmatpush1.msra.mxu0 %v58
    %861 = vmatprep.subr.mxu0 0.0
    %862 = vmatpush2.msra.mxu0 0.0
    %863 = vmatprep.subr.mxu0 0.0
    %864 = vmatpush2.msra.mxu0 0.0
    %865 = vmatprep.subr.mxu0 0.0
    %866 = vmatpush2.msra.mxu0 0.0
    %867 = vmatprep.subr.mxu0 0.0
    %868 = vmatpush2.msra.mxu0 0.0
    %869 = vmatprep.subr.mxu0 0.0
    %870 = vmatpush2.msra.mxu0 0.0
    %871 = vmatprep.subr.mxu0 0.0
    %872 = vmatpush2.msra.mxu0 0.0
    %873 = vmatprep.subr.mxu0 0.0
    %874 = vmatpush2.msra.mxu0 0.0
    %875 = vmatprep.subr.mxu0 0.0
    %876 = vmatpush2.msra.mxu0 0.0
    %877 = vmatprep.subr.mxu0 0.0
    %878 = vmatpush2.msra.mxu0 0.0
    %879 = vmatprep.subr.mxu0 0.0
    %880 = vmatpush2.msra.mxu0 0.0
    %881 = vmatprep.subr.mxu0 0.0
    %882 = vmatpush2.msra.mxu0 0.0
    %883 = vmatprep.subr.mxu0 0.0
    %884 = vmatpush2.msra.mxu0 0.0
    %885 = vmatprep.subr.mxu0 0.0
    %886 = vmatpush2.msra.mxu0 0.0
    %887 = vmatprep.subr.mxu0 0.0
    %888 = vmatpush2.msra.mxu0 0.0
    %889 = vmatprep.subr.mxu0 0.0
    %890 = vmatpush2.msra.mxu0 0.0
    %891 = vmatprep.subr.mxu0 0.0
    %892 = vmatpush2.msra.mxu0 0.0
    %893 = vmatprep.mubr.f32.mxu0 0.0
    %894 = vmatmul.mubr.f32.gmra.mxu0 %v754
    %v895 = vpop.f32.mrf.mxu0
    %v896 = vadd.f32 0.0, %v895
    %v897 = vpop.f32.mrf.mxu0
    %v898 = vadd.f32 0.0, %v897
    %899 = vdwg.mxu0
    %v904 = vcombine.low %v825, %v827
    %v905 = vcombine.low %v896, %v898
    %v907 = vunpack.c.l.s4 1966171168
    %v908 = vunpack.c.0.s8 %v907
    %v909 = vlaneseq
    %v910 = vshrl.u32 %v909, 7
    %v911 = vsub.s32 %v908, %v910
    %v912 = vrot.slane %v904, %v911
    %v914 = vunpack.c.l.s4 1966171168
    %v915 = vunpack.c.0.s8 %v914
    %v916 = vlaneseq
    %v917 = vshrl.u32 %v916, 7
    %v918 = vsub.s32 %v915, %v917
    %v919 = vrot.slane %v905, %v918
    %v920 = vcombine.low %v912, %v919
    %v922 = vunpack.c.l.s4 1966171168
    %v923 = vunpack.c.0.s8 %v922
    %v924 = vlaneseq
    %v925 = vshrl.u32 %v924, 7
    %v926 = vsub.s32 %v923, %v925
    %v927 = vrot.slane %v920, %v926
    %v929 = vadd.f32 %v757, %v927
    %v930 = vxor.u32 %v929, 2147483648
    %v931 = vmul.f32 %v930, 1.442695
    %v932 = vpow.pop %v931
    %v933 = vadd.f32 %v932, 1.0
    %v934 = vrcp.pop %v933
    %v935 = vmul.f32 1.0, %v934
    %v937 = vrot.slane %v929, 1
    %v939 = vxor.u32 %v937, 2147483648
    %v940 = vmul.f32 %v939, 1.442695
    %v941 = vpow.pop %v940
    %v942 = vadd.f32 %v941, 1.0
    %v943 = vrcp.pop %v942
    %v944 = vmul.f32 1.0, %v943
    %v945 = vrot.slane %v929, 2
    %v947 = vtanh.pop %v945
    %v948 = vrot.slane %v929, 3
    %v950 = vxor.u32 %v948, 2147483648
    %v951 = vmul.f32 %v950, 1.442695
    %v952 = vpow.pop %v951
    %v953 = vadd.f32 %v952, 1.0
    %v954 = vrcp.pop %v953
    %v955 = vmul.f32 1.0, %v954
    %v956 = vmul.f32 %v944, %v755
    %v957 = vmul.f32 %v935, %v947
    %v958 = vadd.f32 %v956, %v957
    %v959 = vtanh.pop %v958
    %v960 = vmul.f32 %v955, %v959
    %s961 = sadd.s32 %s49, 3
    %p962 = scmp.lt.s32.totalorder %s961, %s48
    %s963 = scalar_select %p962, 1, 0
    %v964 = vstv %s963
    %vm965 = vcmp.eq.s32.totalorder %v964, 1
    %v966 = vsel %vm965, %v960, %v754
    %v967 = vsel %vm965, %v958, %v755
    %s968 = scalar_lea.vmem [#allocation7], 4
    %v969 = vld [vmem:[%s968] ss:$8 sm:$0xf]
    %970 = vmatprep.subr.mxu0 %v117
    %971 = vmatpush1.msra.mxu0 %v116
    %972 = vmatprep.subr.mxu0 %v113
    %973 = vmatpush1.msra.mxu0 %v112
    %974 = vmatprep.subr.mxu0 %v109
    %975 = vmatpush1.msra.mxu0 %v108
    %976 = vmatprep.subr.mxu0 %v105
    %977 = vmatpush1.msra.mxu0 %v104
    %978 = vmatprep.subr.mxu0 %v101
    %979 = vmatpush1.msra.mxu0 %v100
    %980 = vmatprep.subr.mxu0 %v97
    %981 = vmatpush1.msra.mxu0 %v96
    %982 = vmatprep.subr.mxu0 %v93
    %983 = vmatpush1.msra.mxu0 %v92
    %984 = vmatprep.subr.mxu0 %v89
    %985 = vmatpush1.msra.mxu0 %v88
    %986 = vmatprep.subr.mxu0 %v85
    %987 = vmatpush1.msra.mxu0 %v84
    %988 = vmatprep.subr.mxu0 %v81
    %989 = vmatpush1.msra.mxu0 %v80
    %990 = vmatprep.subr.mxu0 %v77
    %991 = vmatpush1.msra.mxu0 %v76
    %992 = vmatprep.subr.mxu0 %v73
    %993 = vmatpush1.msra.mxu0 %v72
    %994 = vmatprep.subr.mxu0 %v69
    %995 = vmatpush1.msra.mxu0 %v68
    %996 = vmatprep.subr.mxu0 %v65
    %997 = vmatpush1.msra.mxu0 %v64
    %998 = vmatprep.subr.mxu0 %v61
    %999 = vmatpush1.msra.mxu0 %v60
    %1000 = vmatprep.subr.mxu0 %v57
    %1001 = vmatpush1.msra.mxu0 %v56
    %1002 = vmatprep.subr.mxu0 0.0
    %1003 = vmatpush2.msra.mxu0 0.0
    %1004 = vmatprep.subr.mxu0 0.0
    %1005 = vmatpush2.msra.mxu0 0.0
    %1006 = vmatprep.subr.mxu0 0.0
    %1007 = vmatpush2.msra.mxu0 0.0
    %1008 = vmatprep.subr.mxu0 0.0
    %1009 = vmatpush2.msra.mxu0 0.0
    %1010 = vmatprep.subr.mxu0 0.0
    %1011 = vmatpush2.msra.mxu0 0.0
    %1012 = vmatprep.subr.mxu0 0.0
    %1013 = vmatpush2.msra.mxu0 0.0
    %1014 = vmatprep.subr.mxu0 0.0
    %1015 = vmatpush2.msra.mxu0 0.0
    %1016 = vmatprep.subr.mxu0 0.0
    %1017 = vmatpush2.msra.mxu0 0.0
    %1018 = vmatprep.subr.mxu0 0.0
    %1019 = vmatpush2.msra.mxu0 0.0
    %1020 = vmatprep.subr.mxu0 0.0
    %1021 = vmatpush2.msra.mxu0 0.0
    %1022 = vmatprep.subr.mxu0 0.0
    %1023 = vmatpush2.msra.mxu0 0.0
    %1024 = vmatprep.subr.mxu0 0.0
    %1025 = vmatpush2.msra.mxu0 0.0
    %1026 = vmatprep.subr.mxu0 0.0
    %1027 = vmatpush2.msra.mxu0 0.0
    %1028 = vmatprep.subr.mxu0 0.0
    %1029 = vmatpush2.msra.mxu0 0.0
    %1030 = vmatprep.subr.mxu0 0.0
    %1031 = vmatpush2.msra.mxu0 0.0
    %1032 = vmatprep.subr.mxu0 0.0
    %1033 = vmatpush2.msra.mxu0 0.0
    %1034 = vmatprep.mubr.f32.mxu0 0.0
    %1035 = vmatmul.mubr.f32.gmra.mxu0 %v966
    %v1036 = vpop.f32.mrf.mxu0
    %v1037 = vadd.f32 0.0, %v1036
    %v1038 = vpop.f32.mrf.mxu0
    %v1039 = vadd.f32 0.0, %v1038
    %1040 = vdwg.mxu0
    %1041 = vmatprep.subr.mxu0 %v119
    %1042 = vmatpush1.msra.mxu0 %v118
    %1043 = vmatprep.subr.mxu0 %v115
    %1044 = vmatpush1.msra.mxu0 %v114
    %1045 = vmatprep.subr.mxu0 %v111
    %1046 = vmatpush1.msra.mxu0 %v110
    %1047 = vmatprep.subr.mxu0 %v107
    %1048 = vmatpush1.msra.mxu0 %v106
    %1049 = vmatprep.subr.mxu0 %v103
    %1050 = vmatpush1.msra.mxu0 %v102
    %1051 = vmatprep.subr.mxu0 %v99
    %1052 = vmatpush1.msra.mxu0 %v98
    %1053 = vmatprep.subr.mxu0 %v95
    %1054 = vmatpush1.msra.mxu0 %v94
    %1055 = vmatprep.subr.mxu0 %v91
    %1056 = vmatpush1.msra.mxu0 %v90
    %1057 = vmatprep.subr.mxu0 %v87
    %1058 = vmatpush1.msra.mxu0 %v86
    %1059 = vmatprep.subr.mxu0 %v83
    %1060 = vmatpush1.msra.mxu0 %v82
    %1061 = vmatprep.subr.mxu0 %v79
    %1062 = vmatpush1.msra.mxu0 %v78
    %1063 = vmatprep.subr.mxu0 %v75
    %1064 = vmatpush1.msra.mxu0 %v74
    %1065 = vmatprep.subr.mxu0 %v71
    %1066 = vmatpush1.msra.mxu0 %v70
    %1067 = vmatprep.subr.mxu0 %v67
    %1068 = vmatpush1.msra.mxu0 %v66
    %1069 = vmatprep.subr.mxu0 %v63
    %1070 = vmatpush1.msra.mxu0 %v62
    %1071 = vmatprep.subr.mxu0 %v59
    %1072 = vmatpush1.msra.mxu0 %v58
    %1073 = vmatprep.subr.mxu0 0.0
    %1074 = vmatpush2.msra.mxu0 0.0
    %1075 = vmatprep.subr.mxu0 0.0
    %1076 = vmatpush2.msra.mxu0 0.0
    %1077 = vmatprep.subr.mxu0 0.0
    %1078 = vmatpush2.msra.mxu0 0.0
    %1079 = vmatprep.subr.mxu0 0.0
    %1080 = vmatpush2.msra.mxu0 0.0
    %1081 = vmatprep.subr.mxu0 0.0
    %1082 = vmatpush2.msra.mxu0 0.0
    %1083 = vmatprep.subr.mxu0 0.0
    %1084 = vmatpush2.msra.mxu0 0.0
    %1085 = vmatprep.subr.mxu0 0.0
    %1086 = vmatpush2.msra.mxu0 0.0
    %1087 = vmatprep.subr.mxu0 0.0
    %1088 = vmatpush2.msra.mxu0 0.0
    %1089 = vmatprep.subr.mxu0 0.0
    %1090 = vmatpush2.msra.mxu0 0.0
    %1091 = vmatprep.subr.mxu0 0.0
    %1092 = vmatpush2.msra.mxu0 0.0
    %1093 = vmatprep.subr.mxu0 0.0
    %1094 = vmatpush2.msra.mxu0 0.0
    %1095 = vmatprep.subr.mxu0 0.0
    %1096 = vmatpush2.msra.mxu0 0.0
    %1097 = vmatprep.subr.mxu0 0.0
    %1098 = vmatpush2.msra.mxu0 0.0
    %1099 = vmatprep.subr.mxu0 0.0
    %1100 = vmatpush2.msra.mxu0 0.0
    %1101 = vmatprep.subr.mxu0 0.0
    %1102 = vmatpush2.msra.mxu0 0.0
    %1103 = vmatprep.subr.mxu0 0.0
    %1104 = vmatpush2.msra.mxu0 0.0
    %1105 = vmatprep.mubr.f32.mxu0 0.0
    %1106 = vmatmul.mubr.f32.gmra.mxu0 %v966
    %v1107 = vpop.f32.mrf.mxu0
    %v1108 = vadd.f32 0.0, %v1107
    %v1109 = vpop.f32.mrf.mxu0
    %v1110 = vadd.f32 0.0, %v1109
    %1111 = vdwg.mxu0
    %v1116 = vcombine.low %v1037, %v1039
    %v1117 = vcombine.low %v1108, %v1110
    %v1119 = vunpack.c.l.s4 1966171168
    %v1120 = vunpack.c.0.s8 %v1119
    %v1121 = vlaneseq
    %v1122 = vshrl.u32 %v1121, 7
    %v1123 = vsub.s32 %v1120, %v1122
    %v1124 = vrot.slane %v1116, %v1123
    %v1126 = vunpack.c.l.s4 1966171168
    %v1127 = vunpack.c.0.s8 %v1126
    %v1128 = vlaneseq
    %v1129 = vshrl.u32 %v1128, 7
    %v1130 = vsub.s32 %v1127, %v1129
    %v1131 = vrot.slane %v1117, %v1130
    %v1132 = vcombine.low %v1124, %v1131
    %v1134 = vunpack.c.l.s4 1966171168
    %v1135 = vunpack.c.0.s8 %v1134
    %v1136 = vlaneseq
    %v1137 = vshrl.u32 %v1136, 7
    %v1138 = vsub.s32 %v1135, %v1137
    %v1139 = vrot.slane %v1132, %v1138
    %v1141 = vadd.f32 %v969, %v1139
    %v1142 = vxor.u32 %v1141, 2147483648
    %v1143 = vmul.f32 %v1142, 1.442695
    %v1144 = vpow.pop %v1143
    %v1145 = vadd.f32 %v1144, 1.0
    %v1146 = vrcp.pop %v1145
    %v1147 = vmul.f32 1.0, %v1146
    %v1149 = vrot.slane %v1141, 1
    %v1151 = vxor.u32 %v1149, 2147483648
    %v1152 = vmul.f32 %v1151, 1.442695
    %v1153 = vpow.pop %v1152
    %v1154 = vadd.f32 %v1153, 1.0
    %v1155 = vrcp.pop %v1154
    %v1156 = vmul.f32 1.0, %v1155
    %v1157 = vrot.slane %v1141, 2
    %v1159 = vtanh.pop %v1157
    %v1160 = vrot.slane %v1141, 3
    %v1162 = vxor.u32 %v1160, 2147483648
    %v1163 = vmul.f32 %v1162, 1.442695
    %v1164 = vpow.pop %v1163
    %v1165 = vadd.f32 %v1164, 1.0
    %v1166 = vrcp.pop %v1165
    %v1167 = vmul.f32 1.0, %v1166
    %v1168 = vmul.f32 %v1156, %v967
    %v1169 = vmul.f32 %v1147, %v1159
    %v1170 = vadd.f32 %v1168, %v1169
    %v1171 = vtanh.pop %v1170
    %v1172 = vmul.f32 %v1167, %v1171
    %s1173 = sadd.s32 %s49, 4
    %p1174 = scmp.lt.s32.totalorder %s1173, %s48
    %s1175 = scalar_select %p1174, 1, 0
    %v1176 = vstv %s1175
    %vm1177 = vcmp.eq.s32.totalorder %v1176, 1
    %v1178 = vsel %vm1177, %v1172, %v966
    %v1179 = vsel %vm1177, %v1170, %v967
    %s1180 = scalar_lea.vmem [#allocation7], 5
    %v1181 = vld [vmem:[%s1180] ss:$8 sm:$0xf]
    %1182 = vmatprep.subr.mxu0 %v117
    %1183 = vmatpush1.msra.mxu0 %v116
    %1184 = vmatprep.subr.mxu0 %v113
    %1185 = vmatpush1.msra.mxu0 %v112
    %1186 = vmatprep.subr.mxu0 %v109
    %1187 = vmatpush1.msra.mxu0 %v108
    %1188 = vmatprep.subr.mxu0 %v105
    %1189 = vmatpush1.msra.mxu0 %v104
    %1190 = vmatprep.subr.mxu0 %v101
    %1191 = vmatpush1.msra.mxu0 %v100
    %1192 = vmatprep.subr.mxu0 %v97
    %1193 = vmatpush1.msra.mxu0 %v96
    %1194 = vmatprep.subr.mxu0 %v93
    %1195 = vmatpush1.msra.mxu0 %v92
    %1196 = vmatprep.subr.mxu0 %v89
    %1197 = vmatpush1.msra.mxu0 %v88
    %1198 = vmatprep.subr.mxu0 %v85
    %1199 = vmatpush1.msra.mxu0 %v84
    %1200 = vmatprep.subr.mxu0 %v81
    %1201 = vmatpush1.msra.mxu0 %v80
    %1202 = vmatprep.subr.mxu0 %v77
    %1203 = vmatpush1.msra.mxu0 %v76
    %1204 = vmatprep.subr.mxu0 %v73
    %1205 = vmatpush1.msra.mxu0 %v72
    %1206 = vmatprep.subr.mxu0 %v69
    %1207 = vmatpush1.msra.mxu0 %v68
    %1208 = vmatprep.subr.mxu0 %v65
    %1209 = vmatpush1.msra.mxu0 %v64
    %1210 = vmatprep.subr.mxu0 %v61
    %1211 = vmatpush1.msra.mxu0 %v60
    %1212 = vmatprep.subr.mxu0 %v57
    %1213 = vmatpush1.msra.mxu0 %v56
    %1214 = vmatprep.subr.mxu0 0.0
    %1215 = vmatpush2.msra.mxu0 0.0
    %1216 = vmatprep.subr.mxu0 0.0
    %1217 = vmatpush2.msra.mxu0 0.0
    %1218 = vmatprep.subr.mxu0 0.0
    %1219 = vmatpush2.msra.mxu0 0.0
    %1220 = vmatprep.subr.mxu0 0.0
    %1221 = vmatpush2.msra.mxu0 0.0
    %1222 = vmatprep.subr.mxu0 0.0
    %1223 = vmatpush2.msra.mxu0 0.0
    %1224 = vmatprep.subr.mxu0 0.0
    %1225 = vmatpush2.msra.mxu0 0.0
    %1226 = vmatprep.subr.mxu0 0.0
    %1227 = vmatpush2.msra.mxu0 0.0
    %1228 = vmatprep.subr.mxu0 0.0
    %1229 = vmatpush2.msra.mxu0 0.0
    %1230 = vmatprep.subr.mxu0 0.0
    %1231 = vmatpush2.msra.mxu0 0.0
    %1232 = vmatprep.subr.mxu0 0.0
    %1233 = vmatpush2.msra.mxu0 0.0
    %1234 = vmatprep.subr.mxu0 0.0
    %1235 = vmatpush2.msra.mxu0 0.0
    %1236 = vmatprep.subr.mxu0 0.0
    %1237 = vmatpush2.msra.mxu0 0.0
    %1238 = vmatprep.subr.mxu0 0.0
    %1239 = vmatpush2.msra.mxu0 0.0
    %1240 = vmatprep.subr.mxu0 0.0
    %1241 = vmatpush2.msra.mxu0 0.0
    %1242 = vmatprep.subr.mxu0 0.0
    %1243 = vmatpush2.msra.mxu0 0.0
    %1244 = vmatprep.subr.mxu0 0.0
    %1245 = vmatpush2.msra.mxu0 0.0
    %1246 = vmatprep.mubr.f32.mxu0 0.0
    %1247 = vmatmul.mubr.f32.gmra.mxu0 %v1178
    %v1248 = vpop.f32.mrf.mxu0
    %v1249 = vadd.f32 0.0, %v1248
    %v1250 = vpop.f32.mrf.mxu0
    %v1251 = vadd.f32 0.0, %v1250
    %1252 = vdwg.mxu0
    %1253 = vmatprep.subr.mxu0 %v119
    %1254 = vmatpush1.msra.mxu0 %v118
    %1255 = vmatprep.subr.mxu0 %v115
    %1256 = vmatpush1.msra.mxu0 %v114
    %1257 = vmatprep.subr.mxu0 %v111
    %1258 = vmatpush1.msra.mxu0 %v110
    %1259 = vmatprep.subr.mxu0 %v107
    %1260 = vmatpush1.msra.mxu0 %v106
    %1261 = vmatprep.subr.mxu0 %v103
    %1262 = vmatpush1.msra.mxu0 %v102
    %1263 = vmatprep.subr.mxu0 %v99
    %1264 = vmatpush1.msra.mxu0 %v98
    %1265 = vmatprep.subr.mxu0 %v95
    %1266 = vmatpush1.msra.mxu0 %v94
    %1267 = vmatprep.subr.mxu0 %v91
    %1268 = vmatpush1.msra.mxu0 %v90
    %1269 = vmatprep.subr.mxu0 %v87
    %1270 = vmatpush1.msra.mxu0 %v86
    %1271 = vmatprep.subr.mxu0 %v83
    %1272 = vmatpush1.msra.mxu0 %v82
    %1273 = vmatprep.subr.mxu0 %v79
    %1274 = vmatpush1.msra.mxu0 %v78
    %1275 = vmatprep.subr.mxu0 %v75
    %1276 = vmatpush1.msra.mxu0 %v74
    %1277 = vmatprep.subr.mxu0 %v71
    %1278 = vmatpush1.msra.mxu0 %v70
    %1279 = vmatprep.subr.mxu0 %v67
    %1280 = vmatpush1.msra.mxu0 %v66
    %1281 = vmatprep.subr.mxu0 %v63
    %1282 = vmatpush1.msra.mxu0 %v62
    %1283 = vmatprep.subr.mxu0 %v59
    %1284 = vmatpush1.msra.mxu0 %v58
    %1285 = vmatprep.subr.mxu0 0.0
    %1286 = vmatpush2.msra.mxu0 0.0
    %1287 = vmatprep.subr.mxu0 0.0
    %1288 = vmatpush2.msra.mxu0 0.0
    %1289 = vmatprep.subr.mxu0 0.0
    %1290 = vmatpush2.msra.mxu0 0.0
    %1291 = vmatprep.subr.mxu0 0.0
    %1292 = vmatpush2.msra.mxu0 0.0
    %1293 = vmatprep.subr.mxu0 0.0
    %1294 = vmatpush2.msra.mxu0 0.0
    %1295 = vmatprep.subr.mxu0 0.0
    %1296 = vmatpush2.msra.mxu0 0.0
    %1297 = vmatprep.subr.mxu0 0.0
    %1298 = vmatpush2.msra.mxu0 0.0
    %1299 = vmatprep.subr.mxu0 0.0
    %1300 = vmatpush2.msra.mxu0 0.0
    %1301 = vmatprep.subr.mxu0 0.0
    %1302 = vmatpush2.msra.mxu0 0.0
    %1303 = vmatprep.subr.mxu0 0.0
    %1304 = vmatpush2.msra.mxu0 0.0
    %1305 = vmatprep.subr.mxu0 0.0
    %1306 = vmatpush2.msra.mxu0 0.0
    %1307 = vmatprep.subr.mxu0 0.0
    %1308 = vmatpush2.msra.mxu0 0.0
    %1309 = vmatprep.subr.mxu0 0.0
    %1310 = vmatpush2.msra.mxu0 0.0
    %1311 = vmatprep.subr.mxu0 0.0
    %1312 = vmatpush2.msra.mxu0 0.0
    %1313 = vmatprep.subr.mxu0 0.0
    %1314 = vmatpush2.msra.mxu0 0.0
    %1315 = vmatprep.subr.mxu0 0.0
    %1316 = vmatpush2.msra.mxu0 0.0
    %1317 = vmatprep.mubr.f32.mxu0 0.0
    %1318 = vmatmul.mubr.f32.gmra.mxu0 %v1178
    %v1319 = vpop.f32.mrf.mxu0
    %v1320 = vadd.f32 0.0, %v1319
    %v1321 = vpop.f32.mrf.mxu0
    %v1322 = vadd.f32 0.0, %v1321
    %1323 = vdwg.mxu0
    %v1328 = vcombine.low %v1249, %v1251
    %v1329 = vcombine.low %v1320, %v1322
    %v1331 = vunpack.c.l.s4 1966171168
    %v1332 = vunpack.c.0.s8 %v1331
    %v1333 = vlaneseq
    %v1334 = vshrl.u32 %v1333, 7
    %v1335 = vsub.s32 %v1332, %v1334
    %v1336 = vrot.slane %v1328, %v1335
    %v1338 = vunpack.c.l.s4 1966171168
    %v1339 = vunpack.c.0.s8 %v1338
    %v1340 = vlaneseq
    %v1341 = vshrl.u32 %v1340, 7
    %v1342 = vsub.s32 %v1339, %v1341
    %v1343 = vrot.slane %v1329, %v1342
    %v1344 = vcombine.low %v1336, %v1343
    %v1346 = vunpack.c.l.s4 1966171168
    %v1347 = vunpack.c.0.s8 %v1346
    %v1348 = vlaneseq
    %v1349 = vshrl.u32 %v1348, 7
    %v1350 = vsub.s32 %v1347, %v1349
    %v1351 = vrot.slane %v1344, %v1350
    %v1353 = vadd.f32 %v1181, %v1351
    %v1354 = vxor.u32 %v1353, 2147483648
    %v1355 = vmul.f32 %v1354, 1.442695
    %v1356 = vpow.pop %v1355
    %v1357 = vadd.f32 %v1356, 1.0
    %v1358 = vrcp.pop %v1357
    %v1359 = vmul.f32 1.0, %v1358
    %v1361 = vrot.slane %v1353, 1
    %v1363 = vxor.u32 %v1361, 2147483648
    %v1364 = vmul.f32 %v1363, 1.442695
    %v1365 = vpow.pop %v1364
    %v1366 = vadd.f32 %v1365, 1.0
    %v1367 = vrcp.pop %v1366
    %v1368 = vmul.f32 1.0, %v1367
    %v1369 = vrot.slane %v1353, 2
    %v1371 = vtanh.pop %v1369
    %v1372 = vrot.slane %v1353, 3
    %v1374 = vxor.u32 %v1372, 2147483648
    %v1375 = vmul.f32 %v1374, 1.442695
    %v1376 = vpow.pop %v1375
    %v1377 = vadd.f32 %v1376, 1.0
    %v1378 = vrcp.pop %v1377
    %v1379 = vmul.f32 1.0, %v1378
    %v1380 = vmul.f32 %v1368, %v1179
    %v1381 = vmul.f32 %v1359, %v1371
    %v1382 = vadd.f32 %v1380, %v1381
    %v1383 = vtanh.pop %v1382
    %v1384 = vmul.f32 %v1379, %v1383
    %s1385 = sadd.s32 %s49, 5
    %p1386 = scmp.lt.s32.totalorder %s1385, %s48
    %s1387 = scalar_select %p1386, 1, 0
    %v1388 = vstv %s1387
    %vm1389 = vcmp.eq.s32.totalorder %v1388, 1
    %v1390 = vsel %vm1389, %v1384, %v1178
    %v1391 = vsel %vm1389, %v1382, %v1179
    %s1392 = scalar_lea.vmem [#allocation7], 6
    %v1393 = vld [vmem:[%s1392] ss:$8 sm:$0xf]
    %1394 = vmatprep.subr.mxu0 %v117
    %1395 = vmatpush1.msra.mxu0 %v116
    %1396 = vmatprep.subr.mxu0 %v113
    %1397 = vmatpush1.msra.mxu0 %v112
    %1398 = vmatprep.subr.mxu0 %v109
    %1399 = vmatpush1.msra.mxu0 %v108
    %1400 = vmatprep.subr.mxu0 %v105
    %1401 = vmatpush1.msra.mxu0 %v104
    %1402 = vmatprep.subr.mxu0 %v101
    %1403 = vmatpush1.msra.mxu0 %v100
    %1404 = vmatprep.subr.mxu0 %v97
    %1405 = vmatpush1.msra.mxu0 %v96
    %1406 = vmatprep.subr.mxu0 %v93
    %1407 = vmatpush1.msra.mxu0 %v92
    %1408 = vmatprep.subr.mxu0 %v89
    %1409 = vmatpush1.msra.mxu0 %v88
    %1410 = vmatprep.subr.mxu0 %v85
    %1411 = vmatpush1.msra.mxu0 %v84
    %1412 = vmatprep.subr.mxu0 %v81
    %1413 = vmatpush1.msra.mxu0 %v80
    %1414 = vmatprep.subr.mxu0 %v77
    %1415 = vmatpush1.msra.mxu0 %v76
    %1416 = vmatprep.subr.mxu0 %v73
    %1417 = vmatpush1.msra.mxu0 %v72
    %1418 = vmatprep.subr.mxu0 %v69
    %1419 = vmatpush1.msra.mxu0 %v68
    %1420 = vmatprep.subr.mxu0 %v65
    %1421 = vmatpush1.msra.mxu0 %v64
    %1422 = vmatprep.subr.mxu0 %v61
    %1423 = vmatpush1.msra.mxu0 %v60
    %1424 = vmatprep.subr.mxu0 %v57
    %1425 = vmatpush1.msra.mxu0 %v56
    %1426 = vmatprep.subr.mxu0 0.0
    %1427 = vmatpush2.msra.mxu0 0.0
    %1428 = vmatprep.subr.mxu0 0.0
    %1429 = vmatpush2.msra.mxu0 0.0
    %1430 = vmatprep.subr.mxu0 0.0
    %1431 = vmatpush2.msra.mxu0 0.0
    %1432 = vmatprep.subr.mxu0 0.0
    %1433 = vmatpush2.msra.mxu0 0.0
    %1434 = vmatprep.subr.mxu0 0.0
    %1435 = vmatpush2.msra.mxu0 0.0
    %1436 = vmatprep.subr.mxu0 0.0
    %1437 = vmatpush2.msra.mxu0 0.0
    %1438 = vmatprep.subr.mxu0 0.0
    %1439 = vmatpush2.msra.mxu0 0.0
    %1440 = vmatprep.subr.mxu0 0.0
    %1441 = vmatpush2.msra.mxu0 0.0
    %1442 = vmatprep.subr.mxu0 0.0
    %1443 = vmatpush2.msra.mxu0 0.0
    %1444 = vmatprep.subr.mxu0 0.0
    %1445 = vmatpush2.msra.mxu0 0.0
    %1446 = vmatprep.subr.mxu0 0.0
    %1447 = vmatpush2.msra.mxu0 0.0
    %1448 = vmatprep.subr.mxu0 0.0
    %1449 = vmatpush2.msra.mxu0 0.0
    %1450 = vmatprep.subr.mxu0 0.0
    %1451 = vmatpush2.msra.mxu0 0.0
    %1452 = vmatprep.subr.mxu0 0.0
    %1453 = vmatpush2.msra.mxu0 0.0
    %1454 = vmatprep.subr.mxu0 0.0
    %1455 = vmatpush2.msra.mxu0 0.0
    %1456 = vmatprep.subr.mxu0 0.0
    %1457 = vmatpush2.msra.mxu0 0.0
    %1458 = vmatprep.mubr.f32.mxu0 0.0
    %1459 = vmatmul.mubr.f32.gmra.mxu0 %v1390
    %v1460 = vpop.f32.mrf.mxu0
    %v1461 = vadd.f32 0.0, %v1460
    %v1462 = vpop.f32.mrf.mxu0
    %v1463 = vadd.f32 0.0, %v1462
    %1464 = vdwg.mxu0
    %1465 = vmatprep.subr.mxu0 %v119
    %1466 = vmatpush1.msra.mxu0 %v118
    %1467 = vmatprep.subr.mxu0 %v115
    %1468 = vmatpush1.msra.mxu0 %v114
    %1469 = vmatprep.subr.mxu0 %v111
    %1470 = vmatpush1.msra.mxu0 %v110
    %1471 = vmatprep.subr.mxu0 %v107
    %1472 = vmatpush1.msra.mxu0 %v106
    %1473 = vmatprep.subr.mxu0 %v103
    %1474 = vmatpush1.msra.mxu0 %v102
    %1475 = vmatprep.subr.mxu0 %v99
    %1476 = vmatpush1.msra.mxu0 %v98
    %1477 = vmatprep.subr.mxu0 %v95
    %1478 = vmatpush1.msra.mxu0 %v94
    %1479 = vmatprep.subr.mxu0 %v91
    %1480 = vmatpush1.msra.mxu0 %v90
    %1481 = vmatprep.subr.mxu0 %v87
    %1482 = vmatpush1.msra.mxu0 %v86
    %1483 = vmatprep.subr.mxu0 %v83
    %1484 = vmatpush1.msra.mxu0 %v82
    %1485 = vmatprep.subr.mxu0 %v79
    %1486 = vmatpush1.msra.mxu0 %v78
    %1487 = vmatprep.subr.mxu0 %v75
    %1488 = vmatpush1.msra.mxu0 %v74
    %1489 = vmatprep.subr.mxu0 %v71
    %1490 = vmatpush1.msra.mxu0 %v70
    %1491 = vmatprep.subr.mxu0 %v67
    %1492 = vmatpush1.msra.mxu0 %v66
    %1493 = vmatprep.subr.mxu0 %v63
    %1494 = vmatpush1.msra.mxu0 %v62
    %1495 = vmatprep.subr.mxu0 %v59
    %1496 = vmatpush1.msra.mxu0 %v58
    %1497 = vmatprep.subr.mxu0 0.0
    %1498 = vmatpush2.msra.mxu0 0.0
    %1499 = vmatprep.subr.mxu0 0.0
    %1500 = vmatpush2.msra.mxu0 0.0
    %1501 = vmatprep.subr.mxu0 0.0
    %1502 = vmatpush2.msra.mxu0 0.0
    %1503 = vmatprep.subr.mxu0 0.0
    %1504 = vmatpush2.msra.mxu0 0.0
    %1505 = vmatprep.subr.mxu0 0.0
    %1506 = vmatpush2.msra.mxu0 0.0
    %1507 = vmatprep.subr.mxu0 0.0
    %1508 = vmatpush2.msra.mxu0 0.0
    %1509 = vmatprep.subr.mxu0 0.0
    %1510 = vmatpush2.msra.mxu0 0.0
    %1511 = vmatprep.subr.mxu0 0.0
    %1512 = vmatpush2.msra.mxu0 0.0
    %1513 = vmatprep.subr.mxu0 0.0
    %1514 = vmatpush2.msra.mxu0 0.0
    %1515 = vmatprep.subr.mxu0 0.0
    %1516 = vmatpush2.msra.mxu0 0.0
    %1517 = vmatprep.subr.mxu0 0.0
    %1518 = vmatpush2.msra.mxu0 0.0
    %1519 = vmatprep.subr.mxu0 0.0
    %1520 = vmatpush2.msra.mxu0 0.0
    %1521 = vmatprep.subr.mxu0 0.0
    %1522 = vmatpush2.msra.mxu0 0.0
    %1523 = vmatprep.subr.mxu0 0.0
    %1524 = vmatpush2.msra.mxu0 0.0
    %1525 = vmatprep.subr.mxu0 0.0
    %1526 = vmatpush2.msra.mxu0 0.0
    %1527 = vmatprep.subr.mxu0 0.0
    %1528 = vmatpush2.msra.mxu0 0.0
    %1529 = vmatprep.mubr.f32.mxu0 0.0
    %1530 = vmatmul.mubr.f32.gmra.mxu0 %v1390
    %v1531 = vpop.f32.mrf.mxu0
    %v1532 = vadd.f32 0.0, %v1531
    %v1533 = vpop.f32.mrf.mxu0
    %v1534 = vadd.f32 0.0, %v1533
    %1535 = vdwg.mxu0
    %v1540 = vcombine.low %v1461, %v1463
    %v1541 = vcombine.low %v1532, %v1534
    %v1543 = vunpack.c.l.s4 1966171168
    %v1544 = vunpack.c.0.s8 %v1543
    %v1545 = vlaneseq
    %v1546 = vshrl.u32 %v1545, 7
    %v1547 = vsub.s32 %v1544, %v1546
    %v1548 = vrot.slane %v1540, %v1547
    %v1550 = vunpack.c.l.s4 1966171168
    %v1551 = vunpack.c.0.s8 %v1550
    %v1552 = vlaneseq
    %v1553 = vshrl.u32 %v1552, 7
    %v1554 = vsub.s32 %v1551, %v1553
    %v1555 = vrot.slane %v1541, %v1554
    %v1556 = vcombine.low %v1548, %v1555
    %v1558 = vunpack.c.l.s4 1966171168
    %v1559 = vunpack.c.0.s8 %v1558
    %v1560 = vlaneseq
    %v1561 = vshrl.u32 %v1560, 7
    %v1562 = vsub.s32 %v1559, %v1561
    %v1563 = vrot.slane %v1556, %v1562
    %v1565 = vadd.f32 %v1393, %v1563
    %v1566 = vxor.u32 %v1565, 2147483648
    %v1567 = vmul.f32 %v1566, 1.442695
    %v1568 = vpow.pop %v1567
    %v1569 = vadd.f32 %v1568, 1.0
    %v1570 = vrcp.pop %v1569
    %v1571 = vmul.f32 1.0, %v1570
    %v1573 = vrot.slane %v1565, 1
    %v1575 = vxor.u32 %v1573, 2147483648
    %v1576 = vmul.f32 %v1575, 1.442695
    %v1577 = vpow.pop %v1576
    %v1578 = vadd.f32 %v1577, 1.0
    %v1579 = vrcp.pop %v1578
    %v1580 = vmul.f32 1.0, %v1579
    %v1581 = vrot.slane %v1565, 2
    %v1583 = vtanh.pop %v1581
    %v1584 = vrot.slane %v1565, 3
    %v1586 = vxor.u32 %v1584, 2147483648
    %v1587 = vmul.f32 %v1586, 1.442695
    %v1588 = vpow.pop %v1587
    %v1589 = vadd.f32 %v1588, 1.0
    %v1590 = vrcp.pop %v1589
    %v1591 = vmul.f32 1.0, %v1590
    %v1592 = vmul.f32 %v1580, %v1391
    %v1593 = vmul.f32 %v1571, %v1583
    %v1594 = vadd.f32 %v1592, %v1593
    %v1595 = vtanh.pop %v1594
    %v1596 = vmul.f32 %v1591, %v1595
    %s1597 = sadd.s32 %s49, 6
    %p1598 = scmp.lt.s32.totalorder %s1597, %s48
    %s1599 = scalar_select %p1598, 1, 0
    %v1600 = vstv %s1599
    %vm1601 = vcmp.eq.s32.totalorder %v1600, 1
    %v1602 = vsel %vm1601, %v1596, %v1390
    %v1603 = vsel %vm1601, %v1594, %v1391
    %s1604 = scalar_lea.vmem [#allocation7], 7
    %v1605 = vld [vmem:[%s1604] ss:$8 sm:$0xf]
    %1606 = vmatprep.subr.mxu0 %v117
    %1607 = vmatpush1.msra.mxu0 %v116
    %1608 = vmatprep.subr.mxu0 %v113
    %1609 = vmatpush1.msra.mxu0 %v112
    %1610 = vmatprep.subr.mxu0 %v109
    %1611 = vmatpush1.msra.mxu0 %v108
    %1612 = vmatprep.subr.mxu0 %v105
    %1613 = vmatpush1.msra.mxu0 %v104
    %1614 = vmatprep.subr.mxu0 %v101
    %1615 = vmatpush1.msra.mxu0 %v100
    %1616 = vmatprep.subr.mxu0 %v97
    %1617 = vmatpush1.msra.mxu0 %v96
    %1618 = vmatprep.subr.mxu0 %v93
    %1619 = vmatpush1.msra.mxu0 %v92
    %1620 = vmatprep.subr.mxu0 %v89
    %1621 = vmatpush1.msra.mxu0 %v88
    %1622 = vmatprep.subr.mxu0 %v85
    %1623 = vmatpush1.msra.mxu0 %v84
    %1624 = vmatprep.subr.mxu0 %v81
    %1625 = vmatpush1.msra.mxu0 %v80
    %1626 = vmatprep.subr.mxu0 %v77
    %1627 = vmatpush1.msra.mxu0 %v76
    %1628 = vmatprep.subr.mxu0 %v73
    %1629 = vmatpush1.msra.mxu0 %v72
    %1630 = vmatprep.subr.mxu0 %v69
    %1631 = vmatpush1.msra.mxu0 %v68
    %1632 = vmatprep.subr.mxu0 %v65
    %1633 = vmatpush1.msra.mxu0 %v64
    %1634 = vmatprep.subr.mxu0 %v61
    %1635 = vmatpush1.msra.mxu0 %v60
    %1636 = vmatprep.subr.mxu0 %v57
    %1637 = vmatpush1.msra.mxu0 %v56
    %1638 = vmatprep.subr.mxu0 0.0
    %1639 = vmatpush2.msra.mxu0 0.0
    %1640 = vmatprep.subr.mxu0 0.0
    %1641 = vmatpush2.msra.mxu0 0.0
    %1642 = vmatprep.subr.mxu0 0.0
    %1643 = vmatpush2.msra.mxu0 0.0
    %1644 = vmatprep.subr.mxu0 0.0
    %1645 = vmatpush2.msra.mxu0 0.0
    %1646 = vmatprep.subr.mxu0 0.0
    %1647 = vmatpush2.msra.mxu0 0.0
    %1648 = vmatprep.subr.mxu0 0.0
    %1649 = vmatpush2.msra.mxu0 0.0
    %1650 = vmatprep.subr.mxu0 0.0
    %1651 = vmatpush2.msra.mxu0 0.0
    %1652 = vmatprep.subr.mxu0 0.0
    %1653 = vmatpush2.msra.mxu0 0.0
    %1654 = vmatprep.subr.mxu0 0.0
    %1655 = vmatpush2.msra.mxu0 0.0
    %1656 = vmatprep.subr.mxu0 0.0
    %1657 = vmatpush2.msra.mxu0 0.0
    %1658 = vmatprep.subr.mxu0 0.0
    %1659 = vmatpush2.msra.mxu0 0.0
    %1660 = vmatprep.subr.mxu0 0.0
    %1661 = vmatpush2.msra.mxu0 0.0
    %1662 = vmatprep.subr.mxu0 0.0
    %1663 = vmatpush2.msra.mxu0 0.0
    %1664 = vmatprep.subr.mxu0 0.0
    %1665 = vmatpush2.msra.mxu0 0.0
    %1666 = vmatprep.subr.mxu0 0.0
    %1667 = vmatpush2.msra.mxu0 0.0
    %1668 = vmatprep.subr.mxu0 0.0
    %1669 = vmatpush2.msra.mxu0 0.0
    %1670 = vmatprep.mubr.f32.mxu0 0.0
    %1671 = vmatmul.mubr.f32.gmra.mxu0 %v1602
    %v1672 = vpop.f32.mrf.mxu0
    %v1673 = vadd.f32 0.0, %v1672
    %v1674 = vpop.f32.mrf.mxu0
    %v1675 = vadd.f32 0.0, %v1674
    %1676 = vdwg.mxu0
    %1677 = vmatprep.subr.mxu0 %v119
    %1678 = vmatpush1.msra.mxu0 %v118
    %1679 = vmatprep.subr.mxu0 %v115
    %1680 = vmatpush1.msra.mxu0 %v114
    %1681 = vmatprep.subr.mxu0 %v111
    %1682 = vmatpush1.msra.mxu0 %v110
    %1683 = vmatprep.subr.mxu0 %v107
    %1684 = vmatpush1.msra.mxu0 %v106
    %1685 = vmatprep.subr.mxu0 %v103
    %1686 = vmatpush1.msra.mxu0 %v102
    %1687 = vmatprep.subr.mxu0 %v99
    %1688 = vmatpush1.msra.mxu0 %v98
    %1689 = vmatprep.subr.mxu0 %v95
    %1690 = vmatpush1.msra.mxu0 %v94
    %1691 = vmatprep.subr.mxu0 %v91
    %1692 = vmatpush1.msra.mxu0 %v90
    %1693 = vmatprep.subr.mxu0 %v87
    %1694 = vmatpush1.msra.mxu0 %v86
    %1695 = vmatprep.subr.mxu0 %v83
    %1696 = vmatpush1.msra.mxu0 %v82
    %1697 = vmatprep.subr.mxu0 %v79
    %1698 = vmatpush1.msra.mxu0 %v78
    %1699 = vmatprep.subr.mxu0 %v75
    %1700 = vmatpush1.msra.mxu0 %v74
    %1701 = vmatprep.subr.mxu0 %v71
    %1702 = vmatpush1.msra.mxu0 %v70
    %1703 = vmatprep.subr.mxu0 %v67
    %1704 = vmatpush1.msra.mxu0 %v66
    %1705 = vmatprep.subr.mxu0 %v63
    %1706 = vmatpush1.msra.mxu0 %v62
    %1707 = vmatprep.subr.mxu0 %v59
    %1708 = vmatpush1.msra.mxu0 %v58
    %1709 = vmatprep.subr.mxu0 0.0
    %1710 = vmatpush2.msra.mxu0 0.0
    %1711 = vmatprep.subr.mxu0 0.0
    %1712 = vmatpush2.msra.mxu0 0.0
    %1713 = vmatprep.subr.mxu0 0.0
    %1714 = vmatpush2.msra.mxu0 0.0
    %1715 = vmatprep.subr.mxu0 0.0
    %1716 = vmatpush2.msra.mxu0 0.0
    %1717 = vmatprep.subr.mxu0 0.0
    %1718 = vmatpush2.msra.mxu0 0.0
    %1719 = vmatprep.subr.mxu0 0.0
    %1720 = vmatpush2.msra.mxu0 0.0
    %1721 = vmatprep.subr.mxu0 0.0
    %1722 = vmatpush2.msra.mxu0 0.0
    %1723 = vmatprep.subr.mxu0 0.0
    %1724 = vmatpush2.msra.mxu0 0.0
    %1725 = vmatprep.subr.mxu0 0.0
    %1726 = vmatpush2.msra.mxu0 0.0
    %1727 = vmatprep.subr.mxu0 0.0
    %1728 = vmatpush2.msra.mxu0 0.0
    %1729 = vmatprep.subr.mxu0 0.0
    %1730 = vmatpush2.msra.mxu0 0.0
    %1731 = vmatprep.subr.mxu0 0.0
    %1732 = vmatpush2.msra.mxu0 0.0
    %1733 = vmatprep.subr.mxu0 0.0
    %1734 = vmatpush2.msra.mxu0 0.0
    %1735 = vmatprep.subr.mxu0 0.0
    %1736 = vmatpush2.msra.mxu0 0.0
    %1737 = vmatprep.subr.mxu0 0.0
    %1738 = vmatpush2.msra.mxu0 0.0
    %1739 = vmatprep.subr.mxu0 0.0
    %1740 = vmatpush2.msra.mxu0 0.0
    %1741 = vmatprep.mubr.f32.mxu0 0.0
    %1742 = vmatmul.mubr.f32.gmra.mxu0 %v1602
    %v1743 = vpop.f32.mrf.mxu0
    %v1744 = vadd.f32 0.0, %v1743
    %v1745 = vpop.f32.mrf.mxu0
    %v1746 = vadd.f32 0.0, %v1745
    %1747 = vdwg.mxu0
    %v1752 = vcombine.low %v1673, %v1675
    %v1753 = vcombine.low %v1744, %v1746
    %v1755 = vunpack.c.l.s4 1966171168
    %v1756 = vunpack.c.0.s8 %v1755
    %v1757 = vlaneseq
    %v1758 = vshrl.u32 %v1757, 7
    %v1759 = vsub.s32 %v1756, %v1758
    %v1760 = vrot.slane %v1752, %v1759
    %v1762 = vunpack.c.l.s4 1966171168
    %v1763 = vunpack.c.0.s8 %v1762
    %v1764 = vlaneseq
    %v1765 = vshrl.u32 %v1764, 7
    %v1766 = vsub.s32 %v1763, %v1765
    %v1767 = vrot.slane %v1753, %v1766
    %v1768 = vcombine.low %v1760, %v1767
    %v1770 = vunpack.c.l.s4 1966171168
    %v1771 = vunpack.c.0.s8 %v1770
    %v1772 = vlaneseq
    %v1773 = vshrl.u32 %v1772, 7
    %v1774 = vsub.s32 %v1771, %v1773
    %v1775 = vrot.slane %v1768, %v1774
    %v1777 = vadd.f32 %v1605, %v1775
    %v1778 = vxor.u32 %v1777, 2147483648
    %v1779 = vmul.f32 %v1778, 1.442695
    %v1780 = vpow.pop %v1779
    %v1781 = vadd.f32 %v1780, 1.0
    %v1782 = vrcp.pop %v1781
    %v1783 = vmul.f32 1.0, %v1782
    %v1785 = vrot.slane %v1777, 1
    %v1787 = vxor.u32 %v1785, 2147483648
    %v1788 = vmul.f32 %v1787, 1.442695
    %v1789 = vpow.pop %v1788
    %v1790 = vadd.f32 %v1789, 1.0
    %v1791 = vrcp.pop %v1790
    %v1792 = vmul.f32 1.0, %v1791
    %v1793 = vrot.slane %v1777, 2
    %v1795 = vtanh.pop %v1793
    %v1796 = vrot.slane %v1777, 3
    %v1798 = vxor.u32 %v1796, 2147483648
    %v1799 = vmul.f32 %v1798, 1.442695
    %v1800 = vpow.pop %v1799
    %v1801 = vadd.f32 %v1800, 1.0
    %v1802 = vrcp.pop %v1801
    %v1803 = vmul.f32 1.0, %v1802
    %v1804 = vmul.f32 %v1792, %v1603
    %v1805 = vmul.f32 %v1783, %v1795
    %v1806 = vadd.f32 %v1804, %v1805
    %v1807 = vtanh.pop %v1806
    %v1808 = vmul.f32 %v1803, %v1807
    %s1809 = sadd.s32 %s49, 7
    %p1810 = scmp.lt.s32.totalorder %s1809, %s48
    %s1811 = scalar_select %p1810, 1, 0
    %v1812 = vstv %s1811
    %vm1813 = vcmp.eq.s32.totalorder %v1812, 1
    %v1814 = vsel %vm1813, %v1808, %v1602
    %v1815 = vsel %vm1813, %v1806, %v1603
    %1816 = vst [vmem:[#allocation2] sm:$0x1] %v1814
    %1817 = vst [vmem:[#allocation3] sm:$0x1] %v1815
    // Predicated region
    $region30: #{tpu_custom_call.1} parent=1 // pred_check
      %p1818 = pneg %p50
    $region31: #{tpu_custom_call.1} parent=1 // pred_check_branch
      %1820 = sbr.rel (%p1818) target = $region33
    $region32: #{tpu_custom_call.1} parent=1 // pred_region
      %v1821 = vld [vmem:[%s3] sm:$0x1]
      %v1822 = vmul.f32 %v1814, %v1821
      %vm1823 = vcmask 1040384
      %v1824 = vsel %vm1823, %v1822, 0.0
      %1825 = vadd.xlane.f32.xlu0 %v1824
      %v1826 = vpop.xlane.xlu0 %1825
      %v1827 = vld [vmem:[#allocation6] sm:$0x1]
      %v1828 = vadd.f32 %v1826, %v1827
      %vm1829 = vcmask 0
      %1830 = vst.msk [vmem:[#allocation12] sm:$0x1] %vm1829, %v1828
    $region33: #{tpu_custom_call.1} parent=1 // pred_fallthru
      _
    // Predicated region
    $region34: #{tpu_custom_call.1} parent=1 // pred_check
      _
    $region35: #{tpu_custom_call.1} parent=1 // pred_check_branch
      %1832 = sbr.rel (0) target = $region37
    $region36: #{tpu_custom_call.1} parent=1 // pred_region
      %s1834 = ssub.s32 16, 16
      %1835 = vsyncadd [#allocation9], %s1834
      %s1837 = sshll.u32 [#allocation12], 4
      %s1838 = int_to_ptr.vmem [resolvable:$true] %s1837
      %1840 = dma.vmem_to_hbm [thread:$0]  %s1838, 16, %s5, [#allocation9]
    $region37: #{tpu_custom_call.1} parent=1 // pred_fallthru
      _
    // Predicated region
    $region38: #{tpu_custom_call.1} parent=1 // pred_check
      _
    $region39: #{tpu_custom_call.1} parent=1 // pred_check_branch
      %1842 = sbr.rel (0) target = $region41
    $region40: #{tpu_custom_call.1} parent=1 // pred_region
      %1843 = dma.done [#allocation9], 16
    $region41: #{tpu_custom_call.1} parent=1 // pred_fallthru
      _
    %1844 = vsyncpa [#allocation8], 1
    %1845 = vsyncpa [#allocation11], 1
    %1846 = vsyncpa [#allocation9], 1

</llo_original>
